<compile_context>
chip_gen: v7x
topology: tpu7x:2x2x1
jax: 0.10.0
libtpu: 0.0.40
codegen_flags: <defaults>
</compile_context>

<pallas_src>
import jax
import jax.numpy as jnp
from jax.experimental import pallas as pl
from jax.experimental.pallas import tpu as pltpu

Z_DIM = 20          # module-level constant in the reference script
HIDDEN = 256
OUT_DIM = 28 * 28   # 784
N_CHUNK = 256       # layer-3 output chunk width (full MXU width on v6e/v7x)


def _round_up(x, m):
    return (x + m - 1) // m * m


def _generator_kernel(x_ref, w1_ref, b1_ref, w2_ref, b2_ref, w3_ref, b3_ref,
                      o_ref):
    """Fused 3-layer MLP: (Linear+ReLU) x2 -> Linear -> Tanh.

    Layer 1 runs in f32 (K=20, negligible); layers 2/3 use bf16 operands with
    f32 accumulation.  Bias adds / ReLU / tanh stay in f32; only the final
    store casts to the (bf16) output dtype.
    """
    # Layer 1 (f32, tiny K)
    h1 = jnp.dot(x_ref[...], w1_ref[...],
                 preferred_element_type=jnp.float32) + b1_ref[...]
    h1 = jnp.maximum(h1, 0.0).astype(jnp.bfloat16)

    # Layer 2 (bf16 -> f32 acc)
    h2 = jnp.dot(h1, w2_ref[...],
                 preferred_element_type=jnp.float32) + b2_ref[...]
    h2 = jnp.maximum(h2, 0.0).astype(jnp.bfloat16)

    # Layer 3, split over 256-lane chunks, written directly into the output
    # block (small live f32 accumulator, MXU/EUP overlap across chunks).
    # Chunks: [0,256) [256,512) [512,768) [768,784)  -- only the last 16-wide
    # sliver needs masked stores.
    n_chunks = (OUT_DIM + N_CHUNK - 1) // N_CHUNK
    for c in range(n_chunks):
        lo = c * N_CHUNK
        hi = min(lo + N_CHUNK, OUT_DIM)
        h3 = jnp.dot(h2, w3_ref[:, lo:hi],
                     preferred_element_type=jnp.float32) + b3_ref[:, lo:hi]
        o_ref[:, lo:hi] = jnp.tanh(h3).astype(o_ref.dtype)


def prepare_params(params):
    """One-time parameter prep (cast/reshape) -- do NOT run this per forward."""
    w1, b1, w2, b2, w3, b3 = params
    return (
        w1.astype(jnp.float32),                       # layer 1 stays f32
        jnp.reshape(b1, (1, HIDDEN)).astype(jnp.float32),
        w2.astype(jnp.bfloat16),
        jnp.reshape(b2, (1, HIDDEN)).astype(jnp.float32),
        w3.astype(jnp.bfloat16),
        jnp.reshape(b3, (1, OUT_DIM)).astype(jnp.float32),
    )


def generator_liner_forward(x, prepared_params, *, block_m=512):
    """x: (B, Z_DIM) float32 -> (B, 784) bfloat16 (tanh output in [-1, 1])."""
    w1, b1, w2, b2, w3, b3 = prepared_params
    B, z = x.shape
    assert z == Z_DIM, "input feature dim must equal Z_DIM"

    # Batch tiling: multiples of 16 (bf16 sublane packing); big blocks amortize
    # the ~0.35 us/step pipeline overhead.
    B_pad = _round_up(B, 16)
    bm = min(block_m, B_pad)
    # v7x has 2 TensorCores/chip: prefer >=2 grid steps when the batch permits.
    if B_pad // bm < 2 and B_pad >= 32 and (B_pad // 2) % 16 == 0:
        bm = B_pad // 2
    B_pad = _round_up(B_pad, bm)

    x_p = x if B_pad == B else jnp.pad(x, ((0, B_pad - B), (0, 0)))

    grid = (B_pad // bm,)
    const = lambda i: (0, 0)   # weights/biases: same (full) block every step
    in_specs = [
        pl.BlockSpec((bm, Z_DIM), lambda i: (i, 0)),        # x tile (f32)
        pl.BlockSpec((Z_DIM, HIDDEN), const),               # w1 (f32)
        pl.BlockSpec((1, HIDDEN), const),                   # b1 (f32)
        pl.BlockSpec((HIDDEN, HIDDEN), const),               # w2 (bf16)
        pl.BlockSpec((1, HIDDEN), const),                   # b2 (f32)
        pl.BlockSpec((HIDDEN, OUT_DIM), const),              # w3 (bf16)
        pl.BlockSpec((1, OUT_DIM), const),                   # b3 (f32)
    ]
    out_specs = pl.BlockSpec((bm, OUT_DIM), lambda i: (i, 0))

    out = pl.pallas_call(
        _generator_kernel,
        out_shape=jax.ShapeDtypeStruct((B_pad, OUT_DIM), jnp.bfloat16),
        grid_spec=pltpu.PrefetchScalarGridSpec(
            num_scalar_prefetch=0,
            grid=grid,
            in_specs=in_specs,
            out_specs=out_specs,
        ),
        compiler_params=pltpu.CompilerParams(
            dimension_semantics=("parallel",),     # shards batch tiles across TCs
            vmem_limit_bytes=32 * 1024 * 1024,     # above v5e's 16 MiB scoped default
        ),
    )(x_p, w1, b1, w2, b2, w3, b3)

    # Only a (cheap, contiguous) row slice when the batch needed padding;
    # no column slice is ever needed.
    return out if B_pad == B else out[:B]


def init_params(key):
    """Deterministic init mimicking PyTorch's default Linear init (uniform +-1/sqrt(fan_in))."""
    ks = jax.random.split(key, 6)

    def lin(kw, kb, fan_in, fan_out):
        bound = 1.0 / jnp.sqrt(fan_in)
        w = jax.random.uniform(kw, (fan_in, fan_out), jnp.float32, -bound, bound)
        b = jax.random.uniform(kb, (1, fan_out), jnp.float32, -bound, bound)
        return w, b

    w1, b1 = lin(ks[0], ks[1], Z_DIM, HIDDEN)
    w2, b2 = lin(ks[2], ks[3], HIDDEN, HIDDEN)
    w3, b3 = lin(ks[4], ks[5], HIDDEN, OUT_DIM)
    return (w1, b1, w2, b2, w3, b3)


def reference_forward_f32(x, params):
    """Plain-JAX f32 reference matching the PyTorch forward exactly."""
    w1, b1, w2, b2, w3, b3 = params
    h = jnp.maximum(x @ w1 + b1, 0.0)
    h = jnp.maximum(h @ w2 + b2, 0.0)
    return jnp.tanh(h @ w3 + b3)


def reference_forward_mixed(x, params):
    """Reference mirroring the kernel's mixed-precision schedule (bf16 output)."""
    w1, b1, w2, b2, w3, b3 = params
    bf = jnp.bfloat16
    h = jnp.dot(x, w1, preferred_element_type=jnp.float32) + b1          # layer 1 f32
    h = jnp.maximum(h, 0.0).astype(bf)
    h = jnp.dot(h, w2.astype(bf), preferred_element_type=jnp.float32) + b2
    h = jnp.maximum(h, 0.0).astype(bf)
    h = jnp.dot(h, w3.astype(bf), preferred_element_type=jnp.float32) + b3
    return jnp.tanh(h).astype(bf)


if __name__ == "__main__":
    key = jax.random.PRNGKey(0)
    k_params, k_x = jax.random.split(key)

    params = init_params(k_params)
    prepared = prepare_params(params)          # one-time prep, reused across calls

    batch = 64
    x = jax.random.normal(k_x, (batch, Z_DIM), dtype=jnp.float32)

    out = generator_liner_forward(x, prepared)
    out = jax.block_until_ready(out)
    assert out.shape == (batch, OUT_DIM)
    out_f32 = out.astype(jnp.float32)

    # Tight check against a reference using the same mixed-precision schedule.
    ref_mixed = reference_forward_mixed(x, params).astype(jnp.float32)
    assert jnp.allclose(out_f32, ref_mixed, atol=2e-2, rtol=2e-2), \
        "mismatch vs mixed-precision reference"

    # Loose sanity check against the exact f32 (PyTorch-equivalent) forward.
    ref_f32 = reference_forward_f32(x, params)
    assert jnp.allclose(out_f32, ref_f32, atol=1e-1, rtol=1e-1), \
        "mismatch vs f32 reference"

    print("KERNEL_OK")
</pallas_src>

<mosaic_0001>
module attributes {stable_mosaic.version = 11 : i64} {
  func.func @_generator_kernel(%arg0: i32, %arg1: memref<32x20xf32, #tpu.memory_space<vmem>>, %arg2: memref<20x256xf32, #tpu.memory_space<vmem>>, %arg3: memref<1x256xf32, #tpu.memory_space<vmem>>, %arg4: memref<256x256xbf16, #tpu.memory_space<vmem>>, %arg5: memref<1x256xf32, #tpu.memory_space<vmem>>, %arg6: memref<256x784xbf16, #tpu.memory_space<vmem>>, %arg7: memref<1x784xf32, #tpu.memory_space<vmem>>, %arg8: memref<32x784xbf16, #tpu.memory_space<vmem>>) attributes {dimension_semantics = [#tpu.dimension_semantics<parallel>], iteration_bounds = array<i64: 2>, scalar_prefetch = 0 : i64, scratch_operands = 0 : i64, tpu.core_type = #tpu.core_type<tc>, window_params = [{transform_indices = @transform_0, window_bounds = array<i64: 32, 20>}, {pipeline_mode = #tpu.pipeline_mode<synchronous>, transform_indices = @transform_1, window_bounds = array<i64: 20, 256>}, {pipeline_mode = #tpu.pipeline_mode<synchronous>, transform_indices = @transform_2, window_bounds = array<i64: 1, 256>}, {pipeline_mode = #tpu.pipeline_mode<synchronous>, transform_indices = @transform_3, window_bounds = array<i64: 256, 256>}, {pipeline_mode = #tpu.pipeline_mode<synchronous>, transform_indices = @transform_4, window_bounds = array<i64: 1, 256>}, {pipeline_mode = #tpu.pipeline_mode<synchronous>, transform_indices = @transform_5, window_bounds = array<i64: 256, 784>}, {pipeline_mode = #tpu.pipeline_mode<synchronous>, transform_indices = @transform_6, window_bounds = array<i64: 1, 784>}, {transform_indices = @transform_7, window_bounds = array<i64: 32, 784>}]} {
    %c0 = arith.constant 0 : index
    %c0_0 = arith.constant 0 : index
    %0 = vector.load %arg1[%c0, %c0_0] : memref<32x20xf32, #tpu.memory_space<vmem>>, vector<32x20xf32>
    %c0_1 = arith.constant 0 : index
    %c0_2 = arith.constant 0 : index
    %1 = vector.load %arg2[%c0_1, %c0_2] : memref<20x256xf32, #tpu.memory_space<vmem>>, vector<20x256xf32>
    %cst = arith.constant dense<0.000000e+00> : vector<32x256xf32>
    %2 = tpu.matmul %0, %1, %cst {dimension_numbers = #tpu.dot_dimension_numbers<[1], [0], [0], [1], [0, 0, 1, 1], [], []>} : vector<32x20xf32>, vector<20x256xf32>, vector<32x256xf32> -> vector<32x256xf32>
    %c0_3 = arith.constant 0 : index
    %c0_4 = arith.constant 0 : index
    %3 = vector.load %arg3[%c0_3, %c0_4] : memref<1x256xf32, #tpu.memory_space<vmem>>, vector<1x256xf32>
    %4 = vector.broadcast %3 : vector<1x256xf32> to vector<32x256xf32>
    %5 = arith.addf %2, %4 : vector<32x256xf32>
    %cst_5 = arith.constant 0.000000e+00 : f32
    %6 = vector.broadcast %cst_5 : f32 to vector<32x256xf32>
    %7 = arith.maximumf %5, %6 : vector<32x256xf32>
    %8 = arith.truncf %7 : vector<32x256xf32> to vector<32x256xbf16>
    %c0_6 = arith.constant 0 : index
    %c0_7 = arith.constant 0 : index
    %9 = vector.load %arg4[%c0_6, %c0_7] : memref<256x256xbf16, #tpu.memory_space<vmem>>, vector<256x256xbf16>
    %cst_8 = arith.constant dense<0.000000e+00> : vector<32x256xf32>
    %10 = tpu.matmul %8, %9, %cst_8 {dimension_numbers = #tpu.dot_dimension_numbers<[1], [0], [0], [1], [0, 0, 1, 1], [], []>} : vector<32x256xbf16>, vector<256x256xbf16>, vector<32x256xf32> -> vector<32x256xf32>
    %c0_9 = arith.constant 0 : index
    %c0_10 = arith.constant 0 : index
    %11 = vector.load %arg5[%c0_9, %c0_10] : memref<1x256xf32, #tpu.memory_space<vmem>>, vector<1x256xf32>
    %12 = vector.broadcast %11 : vector<1x256xf32> to vector<32x256xf32>
    %13 = arith.addf %10, %12 : vector<32x256xf32>
    %cst_11 = arith.constant 0.000000e+00 : f32
    %14 = vector.broadcast %cst_11 : f32 to vector<32x256xf32>
    %15 = arith.maximumf %13, %14 : vector<32x256xf32>
    %16 = arith.truncf %15 : vector<32x256xf32> to vector<32x256xbf16>
    %c0_12 = arith.constant 0 : index
    %c0_13 = arith.constant 0 : index
    %17 = vector.load %arg6[%c0_12, %c0_13] : memref<256x784xbf16, #tpu.memory_space<vmem>>, vector<256x256xbf16>
    %cst_14 = arith.constant dense<0.000000e+00> : vector<32x256xf32>
    %18 = tpu.matmul %16, %17, %cst_14 {dimension_numbers = #tpu.dot_dimension_numbers<[1], [0], [0], [1], [0, 0, 1, 1], [], []>} : vector<32x256xbf16>, vector<256x256xbf16>, vector<32x256xf32> -> vector<32x256xf32>
    %c0_15 = arith.constant 0 : index
    %c0_16 = arith.constant 0 : index
    %19 = vector.load %arg7[%c0_15, %c0_16] : memref<1x784xf32, #tpu.memory_space<vmem>>, vector<1x256xf32>
    %20 = vector.broadcast %19 : vector<1x256xf32> to vector<32x256xf32>
    %21 = arith.addf %18, %20 : vector<32x256xf32>
    %22 = math.tanh %21 : vector<32x256xf32>
    %23 = arith.truncf %22 : vector<32x256xf32> to vector<32x256xbf16>
    %c0_17 = arith.constant 0 : index
    %c0_18 = arith.constant 0 : index
    %24 = vector.load %arg8[%c0_17, %c0_18] : memref<32x784xbf16, #tpu.memory_space<vmem>>, vector<32x256xbf16>
    tpu.vector_store %arg8[%c0_17, %c0_18], %23 {strides = array<i32>} : memref<32x784xbf16, #tpu.memory_space<vmem>>, vector<32x256xbf16>,
    %c0_19 = arith.constant 0 : index
    %c256 = arith.constant 256 : index
    %25 = vector.load %arg6[%c0_19, %c256] : memref<256x784xbf16, #tpu.memory_space<vmem>>, vector<256x256xbf16>
    %cst_20 = arith.constant dense<0.000000e+00> : vector<32x256xf32>
    %26 = tpu.matmul %16, %25, %cst_20 {dimension_numbers = #tpu.dot_dimension_numbers<[1], [0], [0], [1], [0, 0, 1, 1], [], []>} : vector<32x256xbf16>, vector<256x256xbf16>, vector<32x256xf32> -> vector<32x256xf32>
    %c0_21 = arith.constant 0 : index
    %c256_22 = arith.constant 256 : index
    %27 = vector.load %arg7[%c0_21, %c256_22] : memref<1x784xf32, #tpu.memory_space<vmem>>, vector<1x256xf32>
    %28 = vector.broadcast %27 : vector<1x256xf32> to vector<32x256xf32>
    %29 = arith.addf %26, %28 : vector<32x256xf32>
    %30 = math.tanh %29 : vector<32x256xf32>
    %31 = arith.truncf %30 : vector<32x256xf32> to vector<32x256xbf16>
    %c0_23 = arith.constant 0 : index
    %c256_24 = arith.constant 256 : index
    %32 = vector.load %arg8[%c0_23, %c256_24] : memref<32x784xbf16, #tpu.memory_space<vmem>>, vector<32x256xbf16>
    tpu.vector_store %arg8[%c0_23, %c256_24], %31 {strides = array<i32>} : memref<32x784xbf16, #tpu.memory_space<vmem>>, vector<32x256xbf16>,
    %c0_25 = arith.constant 0 : index
    %c512 = arith.constant 512 : index
    %33 = vector.load %arg6[%c0_25, %c512] : memref<256x784xbf16, #tpu.memory_space<vmem>>, vector<256x256xbf16>
    %cst_26 = arith.constant dense<0.000000e+00> : vector<32x256xf32>
    %34 = tpu.matmul %16, %33, %cst_26 {dimension_numbers = #tpu.dot_dimension_numbers<[1], [0], [0], [1], [0, 0, 1, 1], [], []>} : vector<32x256xbf16>, vector<256x256xbf16>, vector<32x256xf32> -> vector<32x256xf32>
    %c0_27 = arith.constant 0 : index
    %c512_28 = arith.constant 512 : index
    %35 = vector.load %arg7[%c0_27, %c512_28] : memref<1x784xf32, #tpu.memory_space<vmem>>, vector<1x256xf32>
    %36 = vector.broadcast %35 : vector<1x256xf32> to vector<32x256xf32>
    %37 = arith.addf %34, %36 : vector<32x256xf32>
    %38 = math.tanh %37 : vector<32x256xf32>
    %39 = arith.truncf %38 : vector<32x256xf32> to vector<32x256xbf16>
    %c0_29 = arith.constant 0 : index
    %c512_30 = arith.constant 512 : index
    %40 = vector.load %arg8[%c0_29, %c512_30] : memref<32x784xbf16, #tpu.memory_space<vmem>>, vector<32x256xbf16>
    tpu.vector_store %arg8[%c0_29, %c512_30], %39 {strides = array<i32>} : memref<32x784xbf16, #tpu.memory_space<vmem>>, vector<32x256xbf16>,
    %c0_31 = arith.constant 0 : index
    %c768 = arith.constant 768 : index
    %41 = vector.load %arg6[%c0_31, %c768] : memref<256x784xbf16, #tpu.memory_space<vmem>>, vector<256x16xbf16>
    %cst_32 = arith.constant dense<0.000000e+00> : vector<32x16xf32>
    %42 = tpu.matmul %16, %41, %cst_32 {dimension_numbers = #tpu.dot_dimension_numbers<[1], [0], [0], [1], [0, 0, 1, 1], [], []>} : vector<32x256xbf16>, vector<256x16xbf16>, vector<32x16xf32> -> vector<32x16xf32>
    %c0_33 = arith.constant 0 : index
    %c768_34 = arith.constant 768 : index
    %43 = vector.load %arg7[%c0_33, %c768_34] : memref<1x784xf32, #tpu.memory_space<vmem>>, vector<1x16xf32>
    %44 = vector.broadcast %43 : vector<1x16xf32> to vector<32x16xf32>
    %45 = arith.addf %42, %44 : vector<32x16xf32>
    %46 = math.tanh %45 : vector<32x16xf32>
    %47 = arith.truncf %46 : vector<32x16xf32> to vector<32x16xbf16>
    %c0_35 = arith.constant 0 : index
    %c768_36 = arith.constant 768 : index
    %48 = vector.load %arg8[%c0_35, %c768_36] : memref<32x784xbf16, #tpu.memory_space<vmem>>, vector<32x16xbf16>
    tpu.vector_store %arg8[%c0_35, %c768_36], %47 {strides = array<i32>} : memref<32x784xbf16, #tpu.memory_space<vmem>>, vector<32x16xbf16>,
    return
  }
  func.func @transform_0(%arg0: i32) -> (i32, i32) {
    %c0_i32 = arith.constant 0 : i32
    %c0_i32_0 = arith.constant 0 : i32
    return %arg0, %c0_i32 : i32, i32
  }
  func.func @transform_1(%arg0: i32) -> (i32, i32) {
    %c0_i32 = arith.constant 0 : i32
    %c0_i32_0 = arith.constant 0 : i32
    %c0_i32_1 = arith.constant 0 : i32
    return %c0_i32, %c0_i32_0 : i32, i32
  }
  func.func @transform_2(%arg0: i32) -> (i32, i32) {
    %c0_i32 = arith.constant 0 : i32
    %c0_i32_0 = arith.constant 0 : i32
    %c0_i32_1 = arith.constant 0 : i32
    return %c0_i32, %c0_i32_0 : i32, i32
  }
  func.func @transform_3(%arg0: i32) -> (i32, i32) {
    %c0_i32 = arith.constant 0 : i32
    %c0_i32_0 = arith.constant 0 : i32
    %c0_i32_1 = arith.constant 0 : i32
    return %c0_i32, %c0_i32_0 : i32, i32
  }
  func.func @transform_4(%arg0: i32) -> (i32, i32) {
    %c0_i32 = arith.constant 0 : i32
    %c0_i32_0 = arith.constant 0 : i32
    %c0_i32_1 = arith.constant 0 : i32
    return %c0_i32, %c0_i32_0 : i32, i32
  }
  func.func @transform_5(%arg0: i32) -> (i32, i32) {
    %c0_i32 = arith.constant 0 : i32
    %c0_i32_0 = arith.constant 0 : i32
    %c0_i32_1 = arith.constant 0 : i32
    return %c0_i32, %c0_i32_0 : i32, i32
  }
  func.func @transform_6(%arg0: i32) -> (i32, i32) {
    %c0_i32 = arith.constant 0 : i32
    %c0_i32_0 = arith.constant 0 : i32
    %c0_i32_1 = arith.constant 0 : i32
    return %c0_i32, %c0_i32_0 : i32, i32
  }
  func.func @transform_7(%arg0: i32) -> (i32, i32) {
    %c0_i32 = arith.constant 0 : i32
    %c0_i32_0 = arith.constant 0 : i32
    return %arg0, %c0_i32 : i32, i32
  }
}

</mosaic_0001>

<llo_original>
// kernel: tpu_custom_call.1
$region0: #{tpu_custom_call.1}
  #allocation0 [shape = 'u32[]', space=smem, size = 0x4, offset = 0x4, fixed_abs, tag = 'smem constant byte address 0x4 - core index']
  #allocation1 [shape = 'u32[144,128]{1,0:T(1,128)}', space=vmem, size = 0x12000, scoped, tag = 'internal scratch']
  %s0 = inlined_call_operand.vmem [shape: f32[64,20], index: 0, kind: input, shape index: {}]
  %s1 = inlined_call_operand.vmem [shape: f32[20,256], index: 1, kind: input, shape index: {}]
  %s2 = inlined_call_operand.vmem [shape: f32[1,256], index: 2, kind: input, shape index: {}]
  %s3 = inlined_call_operand.vmem [shape: bf16[256,256], index: 3, kind: input, shape index: {}]
  %s4 = inlined_call_operand.vmem [shape: f32[1,256], index: 4, kind: input, shape index: {}]
  %s5 = inlined_call_operand.vmem [shape: bf16[256,784], index: 5, kind: input, shape index: {}]
  %s6 = inlined_call_operand.vmem [shape: f32[1,784], index: 6, kind: input, shape index: {}]
  %s7 = inlined_call_operand.hbm [shape: bf16[64,784], index: 7, kind: output, shape index: {}]
  %s8 = sld [smem:[#allocation0]]
  $region61: #{tpu_custom_call.1} parent=0
    _
  %s10 = ssub.s32 1, %s8
  %s11 = scalar_select 0, %s10, %s8
  $region1: #{tpu_custom_call.1} parent=0
    #allocation2 [shape = 'u8[114688]{0}', space=vmem, size = 0x1c000, scoped, tag = 'output window, operand 0']
    #allocation3 [shape = 's32[2]{0}', space=sflag, size = 0x8, scoped, tag = 'scoped memory for tpu_custom_call.1']
    %12 = vsyncpa [#allocation3], 0
    %s13 = scalar_lea.sflag [#allocation3], 1
    %14 = vsyncpa %s13, 0
    loop: start=0, step=1, limit=4
    $region2: #{tpu_custom_call.1} parent=1 // loop_pre_header
      _
    $region3: #{tpu_custom_call.1} parent=1 // loop_header
      %s16 = sphi 0, %s20
      %p17 = scmp.ge.s32.totalorder %s16, 4
      %s26 = sphi 0, %s28
      %s29 = sphi 0, %s26
      %s30 = sphi 0, %s29
      %s46 = sphi 0, %s30
      %s50 = sphi 0, %s50
      %s52 = sphi 0, %s50
      %s53 = sphi 0, %s52
      %s67 = sphi 0, %s53
      %s71 = sphi 0, %s71
      %s73 = sphi 0, %s71
      %s74 = sphi 0, %s73
      %s88 = sphi 0, %s74
      %s92 = sphi 0, %s92
      %s94 = sphi 0, %s92
      %s95 = sphi 0, %s94
      %s109 = sphi 0, %s95
      %s113 = sphi 0, %s113
      %s115 = sphi 0, %s113
      %s116 = sphi 0, %s115
      %s130 = sphi 0, %s116
      %s134 = sphi 0, %s134
      %s136 = sphi 0, %s134
      %s137 = sphi 0, %s136
      %s151 = sphi 0, %s137
      %s155 = sphi 0, %s155
      %s157 = sphi 0, %s155
      %s158 = sphi 0, %s157
      %s172 = sphi 0, %s158
      %s178 = sphi 0, %s180
      %s181 = sphi 0, %s178
      %s182 = sphi 0, %s181
      %s198 = sphi 0, %s182
    $region4: #{tpu_custom_call.1} parent=1 // loop_header_branch
      %19 = sbr.rel (%p17) target = $region8
    $region5: #{tpu_custom_call.1} parent=1 // loop_body
      %s21 = ssub.s32 %s16, 1
      %s22 = ssub.s32 %s16, 2
      %s23 = sadd.s32 %s16, 1
      %s24 = ssub.s32 %s16, %s23
      %p25 = scmp.eq.s32.totalorder %s24, 0
      %s27 = sadd.s32 %s26, 1
      %s28 = scalar_select %p25, %s26, %s27
      %p31 = pneg %p25
      %p32 = scmp.eq.s32.totalorder %s16, 1
      %p33 = por %p31, %p32
      %p34 = scmp.ne.s32.totalorder %s26, %s29
      %p35 = scmp.eq.s32.totalorder %s16, 0
      %p36 = por %p34, %p35
      %p37 = scmp.ne.s32.totalorder %s26, %s29
      %p38 = scmp.eq.s32.totalorder %s21, 1
      %p39 = por %p37, %p38
      %p40 = scmp.ne.s32.totalorder %s29, %s30
      %p41 = scmp.eq.s32.totalorder %s21, 0
      %p42 = por %p40, %p41
      %p43 = scmp.ne.s32.totalorder %s29, %s30
      %p44 = scmp.eq.s32.totalorder %s22, 1
      %p45 = por %p43, %p44
      %p47 = scmp.ne.s32.totalorder %s30, %s46
      %p48 = scmp.eq.s32.totalorder %s22, 0
      %p49 = por %p47, %p48
      %s51 = sadd.s32 %s50, 1
      %p54 = scmp.eq.s32.totalorder %s16, 1
      %p55 = scmp.ne.s32.totalorder %s50, %s52
      %p56 = scmp.eq.s32.totalorder %s16, 0
      %p57 = por %p55, %p56
      %p58 = scmp.ne.s32.totalorder %s50, %s52
      %p59 = scmp.eq.s32.totalorder %s21, 1
      %p60 = por %p58, %p59
      %p61 = scmp.ne.s32.totalorder %s52, %s53
      %p62 = scmp.eq.s32.totalorder %s21, 0
      %p63 = por %p61, %p62
      %p64 = scmp.ne.s32.totalorder %s52, %s53
      %p65 = scmp.eq.s32.totalorder %s22, 1
      %p66 = por %p64, %p65
      %p68 = scmp.ne.s32.totalorder %s53, %s67
      %p69 = scmp.eq.s32.totalorder %s22, 0
      %p70 = por %p68, %p69
      %s72 = sadd.s32 %s71, 1
      %p75 = scmp.eq.s32.totalorder %s16, 1
      %p76 = scmp.ne.s32.totalorder %s71, %s73
      %p77 = scmp.eq.s32.totalorder %s16, 0
      %p78 = por %p76, %p77
      %p79 = scmp.ne.s32.totalorder %s71, %s73
      %p80 = scmp.eq.s32.totalorder %s21, 1
      %p81 = por %p79, %p80
      %p82 = scmp.ne.s32.totalorder %s73, %s74
      %p83 = scmp.eq.s32.totalorder %s21, 0
      %p84 = por %p82, %p83
      %p85 = scmp.ne.s32.totalorder %s73, %s74
      %p86 = scmp.eq.s32.totalorder %s22, 1
      %p87 = por %p85, %p86
      %p89 = scmp.ne.s32.totalorder %s74, %s88
      %p90 = scmp.eq.s32.totalorder %s22, 0
      %p91 = por %p89, %p90
      %s93 = sadd.s32 %s92, 1
      %p96 = scmp.eq.s32.totalorder %s16, 1
      %p97 = scmp.ne.s32.totalorder %s92, %s94
      %p98 = scmp.eq.s32.totalorder %s16, 0
      %p99 = por %p97, %p98
      %p100 = scmp.ne.s32.totalorder %s92, %s94
      %p101 = scmp.eq.s32.totalorder %s21, 1
      %p102 = por %p100, %p101
      %p103 = scmp.ne.s32.totalorder %s94, %s95
      %p104 = scmp.eq.s32.totalorder %s21, 0
      %p105 = por %p103, %p104
      %p106 = scmp.ne.s32.totalorder %s94, %s95
      %p107 = scmp.eq.s32.totalorder %s22, 1
      %p108 = por %p106, %p107
      %p110 = scmp.ne.s32.totalorder %s95, %s109
      %p111 = scmp.eq.s32.totalorder %s22, 0
      %p112 = por %p110, %p111
      %s114 = sadd.s32 %s113, 1
      %p117 = scmp.eq.s32.totalorder %s16, 1
      %p118 = scmp.ne.s32.totalorder %s113, %s115
      %p119 = scmp.eq.s32.totalorder %s16, 0
      %p120 = por %p118, %p119
      %p121 = scmp.ne.s32.totalorder %s113, %s115
      %p122 = scmp.eq.s32.totalorder %s21, 1
      %p123 = por %p121, %p122
      %p124 = scmp.ne.s32.totalorder %s115, %s116
      %p125 = scmp.eq.s32.totalorder %s21, 0
      %p126 = por %p124, %p125
      %p127 = scmp.ne.s32.totalorder %s115, %s116
      %p128 = scmp.eq.s32.totalorder %s22, 1
      %p129 = por %p127, %p128
      %p131 = scmp.ne.s32.totalorder %s116, %s130
      %p132 = scmp.eq.s32.totalorder %s22, 0
      %p133 = por %p131, %p132
      %s135 = sadd.s32 %s134, 1
      %p138 = scmp.eq.s32.totalorder %s16, 1
      %p139 = scmp.ne.s32.totalorder %s134, %s136
      %p140 = scmp.eq.s32.totalorder %s16, 0
      %p141 = por %p139, %p140
      %p142 = scmp.ne.s32.totalorder %s134, %s136
      %p143 = scmp.eq.s32.totalorder %s21, 1
      %p144 = por %p142, %p143
      %p145 = scmp.ne.s32.totalorder %s136, %s137
      %p146 = scmp.eq.s32.totalorder %s21, 0
      %p147 = por %p145, %p146
      %p148 = scmp.ne.s32.totalorder %s136, %s137
      %p149 = scmp.eq.s32.totalorder %s22, 1
      %p150 = por %p148, %p149
      %p152 = scmp.ne.s32.totalorder %s137, %s151
      %p153 = scmp.eq.s32.totalorder %s22, 0
      %p154 = por %p152, %p153
      %s156 = sadd.s32 %s155, 1
      %p159 = scmp.eq.s32.totalorder %s16, 1
      %p160 = scmp.ne.s32.totalorder %s155, %s157
      %p161 = scmp.eq.s32.totalorder %s16, 0
      %p162 = por %p160, %p161
      %p163 = scmp.ne.s32.totalorder %s155, %s157
      %p164 = scmp.eq.s32.totalorder %s21, 1
      %p165 = por %p163, %p164
      %p166 = scmp.ne.s32.totalorder %s157, %s158
      %p167 = scmp.eq.s32.totalorder %s21, 0
      %p168 = por %p166, %p167
      %p169 = scmp.ne.s32.totalorder %s157, %s158
      %p170 = scmp.eq.s32.totalorder %s22, 1
      %p171 = por %p169, %p170
      %p173 = scmp.ne.s32.totalorder %s158, %s172
      %p174 = scmp.eq.s32.totalorder %s22, 0
      %p175 = por %p173, %p174
      %s176 = ssub.s32 %s16, %s23
      %p177 = scmp.eq.s32.totalorder %s176, 0
      %s179 = sadd.s32 %s178, 1
      %s180 = scalar_select %p177, %s178, %s179
      %p183 = pneg %p177
      %p184 = scmp.eq.s32.totalorder %s16, 1
      %p185 = por %p183, %p184
      %p186 = scmp.ne.s32.totalorder %s178, %s181
      %p187 = scmp.eq.s32.totalorder %s16, 0
      %p188 = por %p186, %p187
      %p189 = scmp.ne.s32.totalorder %s178, %s181
      %p190 = scmp.eq.s32.totalorder %s21, 1
      %p191 = por %p189, %p190
      %p192 = scmp.ne.s32.totalorder %s181, %s182
      %p193 = scmp.eq.s32.totalorder %s21, 0
      %p194 = por %p192, %p193
      %p195 = scmp.ne.s32.totalorder %s181, %s182
      %p196 = scmp.eq.s32.totalorder %s22, 1
      %p197 = por %p195, %p196
      %p199 = scmp.ne.s32.totalorder %s182, %s198
      %p200 = scmp.eq.s32.totalorder %s22, 0
      %p201 = por %p199, %p200
      %p202 = scmp.le.s32.totalorder 1, %s16
      %p203 = scmp.lt.s32.totalorder %s16, 3
      %p204 = pnand %p202, %p203
      %p205 = pneg %p204
      // Predicated region
      $region9: #{tpu_custom_call.1} parent=5 // pred_check
        _
      $region10: #{tpu_custom_call.1} parent=5 // pred_check_branch
        %207 = sbr.rel (%p204) target = $region12
      $region11: #{tpu_custom_call.1} parent=5 // pred_region
        %s208 = ssub.s32 %s16, 1
        // Predicated region
        $region13: #{tpu_custom_call.1} parent=11 // pred_check
          %p209 = pneg %p63
        $region14: #{tpu_custom_call.1} parent=11 // pred_check_branch
          %211 = sbr.rel (%p209) target = $region16
        $region15: #{tpu_custom_call.1} parent=11 // pred_region
          _
        $region16: #{tpu_custom_call.1} parent=11 // pred_fallthru
          _
        // Predicated region
        $region17: #{tpu_custom_call.1} parent=11 // pred_check
          %p212 = pneg %p84
        $region18: #{tpu_custom_call.1} parent=11 // pred_check_branch
          %214 = sbr.rel (%p212) target = $region20
        $region19: #{tpu_custom_call.1} parent=11 // pred_region
          _
        $region20: #{tpu_custom_call.1} parent=11 // pred_fallthru
          _
        // Predicated region
        $region21: #{tpu_custom_call.1} parent=11 // pred_check
          %p215 = pneg %p105
        $region22: #{tpu_custom_call.1} parent=11 // pred_check_branch
          %217 = sbr.rel (%p215) target = $region24
        $region23: #{tpu_custom_call.1} parent=11 // pred_region
          _
        $region24: #{tpu_custom_call.1} parent=11 // pred_fallthru
          _
        // Predicated region
        $region25: #{tpu_custom_call.1} parent=11 // pred_check
          %p218 = pneg %p126
        $region26: #{tpu_custom_call.1} parent=11 // pred_check_branch
          %220 = sbr.rel (%p218) target = $region28
        $region27: #{tpu_custom_call.1} parent=11 // pred_region
          _
        $region28: #{tpu_custom_call.1} parent=11 // pred_fallthru
          _
        // Predicated region
        $region29: #{tpu_custom_call.1} parent=11 // pred_check
          %p221 = pneg %p147
        $region30: #{tpu_custom_call.1} parent=11 // pred_check_branch
          %223 = sbr.rel (%p221) target = $region32
        $region31: #{tpu_custom_call.1} parent=11 // pred_region
          _
        $region32: #{tpu_custom_call.1} parent=11 // pred_fallthru
          _
        // Predicated region
        $region33: #{tpu_custom_call.1} parent=11 // pred_check
          %p224 = pneg %p168
        $region34: #{tpu_custom_call.1} parent=11 // pred_check_branch
          %226 = sbr.rel (%p224) target = $region36
        $region35: #{tpu_custom_call.1} parent=11 // pred_region
          _
        $region36: #{tpu_custom_call.1} parent=11 // pred_fallthru
          _
      $region12: #{tpu_custom_call.1} parent=5 // pred_fallthru
        _
      %p227 = scmp.lt.s32.totalorder %s16, 2
      // Predicated region
      $region37: #{tpu_custom_call.1} parent=5 // pred_check
        %p228 = pneg %p227
      $region38: #{tpu_custom_call.1} parent=5 // pred_check_branch
        %230 = sbr.rel (%p228) target = $region40
      $region39: #{tpu_custom_call.1} parent=5 // pred_region
        // Predicated region
        $region41: #{tpu_custom_call.1} parent=39 // pred_check
          %p231 = pneg %p36
        $region42: #{tpu_custom_call.1} parent=39 // pred_check_branch
          %233 = sbr.rel (%p231) target = $region44
        $region43: #{tpu_custom_call.1} parent=39 // pred_region
          %s234 = smul.u32 4, %s16
          %p235 = scmp.lt.s32.totalorder %s234, 7
          %s236 = scalar_select %p235, %s234, 7
          %s237 = smul.addr %s236, 8
          %s238 = scalar_lea.vmem %s0, %s237
          %s239 = smul.u32 4, %s16
        $region44: #{tpu_custom_call.1} parent=39 // pred_fallthru
          _
      $region40: #{tpu_custom_call.1} parent=5 // pred_fallthru
        _
      %p240 = scmp.le.s32.totalorder 1, %s16
      %p241 = scmp.lt.s32.totalorder %s16, 3
      %p242 = pnand %p240, %p241
      %p243 = pneg %p242
      // Predicated region
      $region45: #{tpu_custom_call.1} parent=5 // pred_check
        _
      $region46: #{tpu_custom_call.1} parent=5 // pred_check_branch
        %245 = sbr.rel (%p242) target = $region48
      $region47: #{tpu_custom_call.1} parent=5 // pred_region
        %s246 = ssub.s32 %s16, 1
        %s247 = smul.u32 4, %s21
        %p248 = scmp.lt.s32.totalorder %s247, 7
        %s249 = scalar_select %p248, %s247, 7
        %s250 = smul.addr %s249, 8
        %s251 = scalar_lea.vmem %s0, %s250
        %p252 = pneg %p42
        %p253 = pneg %p39
        %p254 = pneg %p63
        %p255 = pneg %p60
        %p256 = pneg %p84
        %p257 = pneg %p81
        %p258 = pneg %p105
        %p259 = pneg %p102
        %p260 = pneg %p126
        %p261 = pneg %p123
        %p262 = pneg %p147
        %p263 = pneg %p144
        %p264 = pneg %p168
        %p265 = pneg %p165
        %p266 = pneg %p194
        %p267 = pneg %p191
        %s268 = sand.u32 %s181, 1
        %s269 = scalar_lea.sflag [#allocation3], %s268
        %s270 = sand.u32 %s181, 1
        %s271 = smul.addr %s270, 112
        %s272 = scalar_lea.vmem [#allocation2], %s271
        %s273 = smul.u32 4, %s21
        %p274 = scmp.lt.s32.totalorder %s273, 7
        %s275 = scalar_select %p274, %s273, 7
        %s276 = smul.addr %s275, 8
        %s277 = scalar_lea.vmem %s0, %s276
        %s278 = smul.u32 4, %s21
        %s279 = smul.u32 4, %s21
        %v281 = vld [vmem:[%s277] sm:$0xff]
        %v282 = vld [vmem:[%s277 + $0x8] sm:$0xff]
        %v283 = vld [vmem:[%s277 + $0x10] sm:$0xff]
        %v284 = vld [vmem:[%s277 + $0x18] sm:$0xff]
        %v285 = vld [vmem:[%s1] sm:$0xff]
        %v286 = vld [vmem:[%s1 + $0x8] sm:$0xff]
        %v287 = vld [vmem:[%s1 + $0x10] sm:$0xff]
        %v288 = vld [vmem:[%s1 + $0x18] sm:$0xff]
        %v289 = vld [vmem:[%s1 + $0x20] sm:$0xf]
        %v290 = vld [vmem:[%s1 + $0x28] sm:$0xf]
        %v291 = vld [vmem:[%s2] sm:$0x3]
        %v293 = vlaneseq
        %v294 = vshrl.u32 %v293, 7
        %v295 = vsub.s32 0, %v294
        %v296 = vrot.slane %v291, %v295
        %v297 = vlaneseq
        %v298 = vshrl.u32 %v297, 7
        %v299 = vsub.s32 1, %v298
        %v300 = vrot.slane %v291, %v299
        %vm303 = vcmask 162816
        %v305 = vsel %vm303, %v281, 0
        %v308 = vsel %vm303, %v282, 0
        %v311 = vsel %vm303, %v283, 0
        %v314 = vsel %vm303, %v284, 0
        %vm316 = vcmask 1043456
        %v318 = vsel %vm316, %v289, 0
        %v321 = vsel %vm316, %v290, 0
        %323 = vmatprep.subr.mxu0 %v286
        %324 = vmatpush1.msra.mxu0 %v285
        %325 = vmatprep.subr.mxu0 %v288
        %326 = vmatpush1.msra.mxu0 %v287
        %327 = vmatprep.subr.mxu0 %v321
        %328 = vmatpush1.msra.mxu0 %v318
        %329 = vmatprep.subr.mxu0 0.0
        %330 = vmatpush1.msra.mxu0 0.0
        %331 = vmatprep.subr.mxu0 0.0
        %332 = vmatpush1.msra.mxu0 0.0
        %333 = vmatprep.subr.mxu0 0.0
        %334 = vmatpush1.msra.mxu0 0.0
        %335 = vmatprep.subr.mxu0 0.0
        %336 = vmatpush1.msra.mxu0 0.0
        %337 = vmatprep.subr.mxu0 0.0
        %338 = vmatpush1.msra.mxu0 0.0
        %339 = vmatprep.subr.mxu0 0.0
        %340 = vmatpush1.msra.mxu0 0.0
        %341 = vmatprep.subr.mxu0 0.0
        %342 = vmatpush1.msra.mxu0 0.0
        %343 = vmatprep.subr.mxu0 0.0
        %344 = vmatpush1.msra.mxu0 0.0
        %345 = vmatprep.subr.mxu0 0.0
        %346 = vmatpush1.msra.mxu0 0.0
        %347 = vmatprep.subr.mxu0 0.0
        %348 = vmatpush1.msra.mxu0 0.0
        %349 = vmatprep.subr.mxu0 0.0
        %350 = vmatpush1.msra.mxu0 0.0
        %351 = vmatprep.subr.mxu0 0.0
        %352 = vmatpush1.msra.mxu0 0.0
        %353 = vmatprep.subr.mxu0 0.0
        %354 = vmatpush1.msra.mxu0 0.0
        %355 = vmatprep.subr.mxu0 0.0
        %356 = vmatpush1.msra.mxu0 0.0
        %357 = vmatprep.subr.mxu0 0.0
        %358 = vmatpush1.msra.mxu0 0.0
        %359 = vmatprep.subr.mxu0 0.0
        %360 = vmatpush1.msra.mxu0 0.0
        %361 = vmatprep.subr.mxu0 0.0
        %362 = vmatpush1.msra.mxu0 0.0
        %363 = vmatprep.subr.mxu0 0.0
        %364 = vmatpush1.msra.mxu0 0.0
        %365 = vmatprep.subr.mxu0 0.0
        %366 = vmatpush1.msra.mxu0 0.0
        %367 = vmatprep.subr.mxu0 0.0
        %368 = vmatpush1.msra.mxu0 0.0
        %369 = vmatprep.subr.mxu0 0.0
        %370 = vmatpush1.msra.mxu0 0.0
        %371 = vmatprep.subr.mxu0 0.0
        %372 = vmatpush1.msra.mxu0 0.0
        %373 = vmatprep.subr.mxu0 0.0
        %374 = vmatpush1.msra.mxu0 0.0
        %375 = vmatprep.subr.mxu0 0.0
        %376 = vmatpush1.msra.mxu0 0.0
        %377 = vmatprep.subr.mxu0 0.0
        %378 = vmatpush1.msra.mxu0 0.0
        %379 = vmatprep.subr.mxu0 0.0
        %380 = vmatpush1.msra.mxu0 0.0
        %381 = vmatprep.subr.mxu0 0.0
        %382 = vmatpush1.msra.mxu0 0.0
        %383 = vmatprep.subr.mxu0 0.0
        %384 = vmatpush1.msra.mxu0 0.0
        %385 = vmatprep.subr.mxu0 0.0
        %386 = vmatpush1.msra.mxu0 0.0
        %387 = vmatprep.mubr.f32.mxu0 0.0
        %388 = vmatmul.mubr.f32.gmra.mrb[0].mxu0 %v305
        %v389 = vpop.f32.mrb[0].mxu0
        %v390 = vadd.f32 %v296, %v389
        %v391 = vpop.f32.mrb[0].mxu0
        %v392 = vadd.f32 %v300, %v391
        %393 = vmatprep.mubr.f32.mxu0 0.0
        %394 = vmatmul.mubr.f32.gmra.mrb[0].mxu0 %v308
        %v395 = vpop.f32.mrb[0].mxu0
        %v396 = vadd.f32 %v296, %v395
        %v397 = vpop.f32.mrb[0].mxu0
        %v398 = vadd.f32 %v300, %v397
        %399 = vmatprep.mubr.f32.mxu0 0.0
        %400 = vmatmul.mubr.f32.gmra.mrb[0].mxu0 %v311
        %v401 = vpop.f32.mrb[0].mxu0
        %v402 = vadd.f32 %v296, %v401
        %v403 = vpop.f32.mrb[0].mxu0
        %v404 = vadd.f32 %v300, %v403
        %405 = vmatprep.mubr.f32.mxu0 0.0
        %406 = vmatmul.mubr.f32.gmra.mrb[0].mxu0 %v314
        %v407 = vpop.f32.mrb[0].mxu0
        %v408 = vadd.f32 %v296, %v407
        %v409 = vpop.f32.mrb[0].mxu0
        %v410 = vadd.f32 %v300, %v409
        %411 = vdwg.mxu0
        %v412 = vmax.f32 %v390, 0.0
        %v413 = vmax.f32 %v392, 0.0
        %v414 = vmax.f32 %v396, 0.0
        %v415 = vmax.f32 %v398, 0.0
        %v416 = vmax.f32 %v402, 0.0
        %v417 = vmax.f32 %v404, 0.0
        %v418 = vmax.f32 %v408, 0.0
        %v419 = vmax.f32 %v410, 0.0
        %v420 = vpack.c.bf16 %v414, %v412
        %v421 = vpack.c.bf16 %v415, %v413
        %v422 = vpack.c.bf16 %v418, %v416
        %v423 = vpack.c.bf16 %v419, %v417
        %v424 = vld [vmem:[%s3] sm:$0xff]
        %v425 = vld [vmem:[%s3 + $0x8] sm:$0xff]
        %v426 = vld [vmem:[%s3 + $0x10] sm:$0xff]
        %v427 = vld [vmem:[%s3 + $0x18] sm:$0xff]
        %v428 = vld [vmem:[%s3 + $0x20] sm:$0xff]
        %v429 = vld [vmem:[%s3 + $0x28] sm:$0xff]
        %v430 = vld [vmem:[%s3 + $0x30] sm:$0xff]
        %v431 = vld [vmem:[%s3 + $0x38] sm:$0xff]
        %v432 = vld [vmem:[%s3 + $0x40] sm:$0xff]
        %v433 = vld [vmem:[%s3 + $0x48] sm:$0xff]
        %v434 = vld [vmem:[%s3 + $0x50] sm:$0xff]
        %v435 = vld [vmem:[%s3 + $0x58] sm:$0xff]
        %v436 = vld [vmem:[%s3 + $0x60] sm:$0xff]
        %v437 = vld [vmem:[%s3 + $0x68] sm:$0xff]
        %v438 = vld [vmem:[%s3 + $0x70] sm:$0xff]
        %v439 = vld [vmem:[%s3 + $0x78] sm:$0xff]
        %v440 = vld [vmem:[%s3 + $0x80] sm:$0xff]
        %v441 = vld [vmem:[%s3 + $0x88] sm:$0xff]
        %v442 = vld [vmem:[%s3 + $0x90] sm:$0xff]
        %v443 = vld [vmem:[%s3 + $0x98] sm:$0xff]
        %v444 = vld [vmem:[%s3 + $0xa0] sm:$0xff]
        %v445 = vld [vmem:[%s3 + $0xa8] sm:$0xff]
        %v446 = vld [vmem:[%s3 + $0xb0] sm:$0xff]
        %v447 = vld [vmem:[%s3 + $0xb8] sm:$0xff]
        %v448 = vld [vmem:[%s3 + $0xc0] sm:$0xff]
        %v449 = vld [vmem:[%s3 + $0xc8] sm:$0xff]
        %v450 = vld [vmem:[%s3 + $0xd0] sm:$0xff]
        %v451 = vld [vmem:[%s3 + $0xd8] sm:$0xff]
        %v452 = vld [vmem:[%s3 + $0xe0] sm:$0xff]
        %v453 = vld [vmem:[%s3 + $0xe8] sm:$0xff]
        %v454 = vld [vmem:[%s3 + $0xf0] sm:$0xff]
        %v455 = vld [vmem:[%s3 + $0xf8] sm:$0xff]
        %v456 = vld [vmem:[%s4] sm:$0x3]
        %v458 = vlaneseq
        %v459 = vshrl.u32 %v458, 7
        %v460 = vsub.s32 0, %v459
        %v461 = vrot.slane %v456, %v460
        %v462 = vlaneseq
        %v463 = vshrl.u32 %v462, 7
        %v464 = vsub.s32 1, %v463
        %v465 = vrot.slane %v456, %v464
        %v500 = vunpack.c.l.b16 %v424
        %v501 = vunpack.c.h.b16 %v424
        %v502 = vunpack.c.l.b16 %v425
        %v503 = vunpack.c.h.b16 %v425
        %v504 = vunpack.c.l.b16 %v426
        %v505 = vunpack.c.h.b16 %v426
        %v506 = vunpack.c.l.b16 %v427
        %v507 = vunpack.c.h.b16 %v427
        %v508 = vunpack.c.l.b16 %v428
        %v509 = vunpack.c.h.b16 %v428
        %v510 = vunpack.c.l.b16 %v429
        %v511 = vunpack.c.h.b16 %v429
        %v512 = vunpack.c.l.b16 %v430
        %v513 = vunpack.c.h.b16 %v430
        %v514 = vunpack.c.l.b16 %v431
        %v515 = vunpack.c.h.b16 %v431
        %v516 = vunpack.c.l.b16 %v432
        %v517 = vunpack.c.h.b16 %v432
        %v518 = vunpack.c.l.b16 %v433
        %v519 = vunpack.c.h.b16 %v433
        %v520 = vunpack.c.l.b16 %v434
        %v521 = vunpack.c.h.b16 %v434
        %v522 = vunpack.c.l.b16 %v435
        %v523 = vunpack.c.h.b16 %v435
        %v524 = vunpack.c.l.b16 %v436
        %v525 = vunpack.c.h.b16 %v436
        %v526 = vunpack.c.l.b16 %v437
        %v527 = vunpack.c.h.b16 %v437
        %v528 = vunpack.c.l.b16 %v438
        %v529 = vunpack.c.h.b16 %v438
        %v530 = vunpack.c.l.b16 %v439
        %v531 = vunpack.c.h.b16 %v439
        %v532 = vunpack.c.l.b16 %v440
        %v533 = vunpack.c.h.b16 %v440
        %v534 = vunpack.c.l.b16 %v441
        %v535 = vunpack.c.h.b16 %v441
        %v536 = vunpack.c.l.b16 %v442
        %v537 = vunpack.c.h.b16 %v442
        %v538 = vunpack.c.l.b16 %v443
        %v539 = vunpack.c.h.b16 %v443
        %v540 = vunpack.c.l.b16 %v444
        %v541 = vunpack.c.h.b16 %v444
        %v542 = vunpack.c.l.b16 %v445
        %v543 = vunpack.c.h.b16 %v445
        %v544 = vunpack.c.l.b16 %v446
        %v545 = vunpack.c.h.b16 %v446
        %v546 = vunpack.c.l.b16 %v447
        %v547 = vunpack.c.h.b16 %v447
        %v548 = vunpack.c.l.b16 %v448
        %v549 = vunpack.c.h.b16 %v448
        %v550 = vunpack.c.l.b16 %v449
        %v551 = vunpack.c.h.b16 %v449
        %v552 = vunpack.c.l.b16 %v450
        %v553 = vunpack.c.h.b16 %v450
        %v554 = vunpack.c.l.b16 %v451
        %v555 = vunpack.c.h.b16 %v451
        %v556 = vunpack.c.l.b16 %v452
        %v557 = vunpack.c.h.b16 %v452
        %v558 = vunpack.c.l.b16 %v453
        %v559 = vunpack.c.h.b16 %v453
        %v560 = vunpack.c.l.b16 %v454
        %v561 = vunpack.c.h.b16 %v454
        %v562 = vunpack.c.l.b16 %v455
        %v563 = vunpack.c.h.b16 %v455
        %v564 = vpack.c.b16 %v502, %v500
        %v565 = vpack.c.b16 %v503, %v501
        %v566 = vpack.c.b16 %v506, %v504
        %v567 = vpack.c.b16 %v507, %v505
        %v568 = vpack.c.b16 %v510, %v508
        %v569 = vpack.c.b16 %v511, %v509
        %v570 = vpack.c.b16 %v514, %v512
        %v571 = vpack.c.b16 %v515, %v513
        %v572 = vpack.c.b16 %v518, %v516
        %v573 = vpack.c.b16 %v519, %v517
        %v574 = vpack.c.b16 %v522, %v520
        %v575 = vpack.c.b16 %v523, %v521
        %v576 = vpack.c.b16 %v526, %v524
        %v577 = vpack.c.b16 %v527, %v525
        %v578 = vpack.c.b16 %v530, %v528
        %v579 = vpack.c.b16 %v531, %v529
        %v580 = vpack.c.b16 %v534, %v532
        %v581 = vpack.c.b16 %v535, %v533
        %v582 = vpack.c.b16 %v538, %v536
        %v583 = vpack.c.b16 %v539, %v537
        %v584 = vpack.c.b16 %v542, %v540
        %v585 = vpack.c.b16 %v543, %v541
        %v586 = vpack.c.b16 %v546, %v544
        %v587 = vpack.c.b16 %v547, %v545
        %v588 = vpack.c.b16 %v550, %v548
        %v589 = vpack.c.b16 %v551, %v549
        %v590 = vpack.c.b16 %v554, %v552
        %v591 = vpack.c.b16 %v555, %v553
        %v592 = vpack.c.b16 %v558, %v556
        %v593 = vpack.c.b16 %v559, %v557
        %v594 = vpack.c.b16 %v562, %v560
        %v595 = vpack.c.b16 %v563, %v561
        %628 = vmatprep.subr.bf16.mxu0 %v565
        %629 = vmatpush1.bf16.msra.mxu0 %v564
        %630 = vmatprep.subr.bf16.mxu0 %v567
        %631 = vmatpush1.bf16.msra.mxu0 %v566
        %632 = vmatprep.subr.bf16.mxu0 %v569
        %633 = vmatpush1.bf16.msra.mxu0 %v568
        %634 = vmatprep.subr.bf16.mxu0 %v571
        %635 = vmatpush1.bf16.msra.mxu0 %v570
        %636 = vmatprep.subr.bf16.mxu0 %v573
        %637 = vmatpush1.bf16.msra.mxu0 %v572
        %638 = vmatprep.subr.bf16.mxu0 %v575
        %639 = vmatpush1.bf16.msra.mxu0 %v574
        %640 = vmatprep.subr.bf16.mxu0 %v577
        %641 = vmatpush1.bf16.msra.mxu0 %v576
        %642 = vmatprep.subr.bf16.mxu0 %v579
        %643 = vmatpush1.bf16.msra.mxu0 %v578
        %644 = vmatprep.subr.bf16.mxu0 %v581
        %645 = vmatpush1.bf16.msra.mxu0 %v580
        %646 = vmatprep.subr.bf16.mxu0 %v583
        %647 = vmatpush1.bf16.msra.mxu0 %v582
        %648 = vmatprep.subr.bf16.mxu0 %v585
        %649 = vmatpush1.bf16.msra.mxu0 %v584
        %650 = vmatprep.subr.bf16.mxu0 %v587
        %651 = vmatpush1.bf16.msra.mxu0 %v586
        %652 = vmatprep.subr.bf16.mxu0 %v589
        %653 = vmatpush1.bf16.msra.mxu0 %v588
        %654 = vmatprep.subr.bf16.mxu0 %v591
        %655 = vmatpush1.bf16.msra.mxu0 %v590
        %656 = vmatprep.subr.bf16.mxu0 %v593
        %657 = vmatpush1.bf16.msra.mxu0 %v592
        %658 = vmatprep.subr.bf16.mxu0 %v595
        %659 = vmatpush1.bf16.msra.mxu0 %v594
        %660 = vmatprep.mubr.bf16.mxu0 %v421
        %661 = vmatmul.mubr.bf16.gmra.mrb[0].mxu0 %v420
        %v662 = vpop.f32.mrb[0].mxu0
        %v663 = vadd.f32 %v461, %v662
        %v664 = vpop.f32.mrb[0].mxu0
        %v665 = vadd.f32 %v465, %v664
        %v666 = vpop.f32.mrb[0].mxu0
        %v667 = vadd.f32 %v461, %v666
        %v668 = vpop.f32.mrb[0].mxu0
        %v669 = vadd.f32 %v465, %v668
        %670 = vmatprep.mubr.bf16.mxu0 %v423
        %671 = vmatmul.mubr.bf16.gmra.mrb[0].mxu0 %v422
        %v672 = vpop.f32.mrb[0].mxu0
        %v673 = vadd.f32 %v461, %v672
        %v674 = vpop.f32.mrb[0].mxu0
        %v675 = vadd.f32 %v465, %v674
        %v676 = vpop.f32.mrb[0].mxu0
        %v677 = vadd.f32 %v461, %v676
        %v678 = vpop.f32.mrb[0].mxu0
        %v679 = vadd.f32 %v465, %v678
        %680 = vdwg.mxu0
        %v681 = vmax.f32 %v663, 0.0
        %v682 = vmax.f32 %v665, 0.0
        %v683 = vmax.f32 %v667, 0.0
        %v684 = vmax.f32 %v669, 0.0
        %v685 = vmax.f32 %v673, 0.0
        %v686 = vmax.f32 %v675, 0.0
        %v687 = vmax.f32 %v677, 0.0
        %v688 = vmax.f32 %v679, 0.0
        %v689 = vpack.c.bf16 %v683, %v681
        %v690 = vpack.c.bf16 %v684, %v682
        %v691 = vpack.c.bf16 %v687, %v685
        %v692 = vpack.c.bf16 %v688, %v686
        %v693 = vld [vmem:[%s5] sm:$0xff]
        %v694 = vld [vmem:[%s5 + $0x1c] sm:$0xff]
        %v695 = vld [vmem:[%s5 + $0x38] sm:$0xff]
        %v696 = vld [vmem:[%s5 + $0x54] sm:$0xff]
        %v697 = vld [vmem:[%s5 + $0x70] sm:$0xff]
        %v698 = vld [vmem:[%s5 + $0x8c] sm:$0xff]
        %v699 = vld [vmem:[%s5 + $0xa8] sm:$0xff]
        %v700 = vld [vmem:[%s5 + $0xc4] sm:$0xff]
        %v701 = vld [vmem:[%s5 + $0xe0] sm:$0xff]
        %v702 = vld [vmem:[%s5 + $0xfc] sm:$0xff]
        %v703 = vld [vmem:[%s5 + $0x118] sm:$0xff]
        %v704 = vld [vmem:[%s5 + $0x134] sm:$0xff]
        %v705 = vld [vmem:[%s5 + $0x150] sm:$0xff]
        %v706 = vld [vmem:[%s5 + $0x16c] sm:$0xff]
        %v707 = vld [vmem:[%s5 + $0x188] sm:$0xff]
        %v708 = vld [vmem:[%s5 + $0x1a4] sm:$0xff]
        %v709 = vld [vmem:[%s5 + $0x1c0] sm:$0xff]
        %v710 = vld [vmem:[%s5 + $0x1dc] sm:$0xff]
        %v711 = vld [vmem:[%s5 + $0x1f8] sm:$0xff]
        %v712 = vld [vmem:[%s5 + $0x214] sm:$0xff]
        %v713 = vld [vmem:[%s5 + $0x230] sm:$0xff]
        %v714 = vld [vmem:[%s5 + $0x24c] sm:$0xff]
        %v715 = vld [vmem:[%s5 + $0x268] sm:$0xff]
        %v716 = vld [vmem:[%s5 + $0x284] sm:$0xff]
        %v717 = vld [vmem:[%s5 + $0x2a0] sm:$0xff]
        %v718 = vld [vmem:[%s5 + $0x2bc] sm:$0xff]
        %v719 = vld [vmem:[%s5 + $0x2d8] sm:$0xff]
        %v720 = vld [vmem:[%s5 + $0x2f4] sm:$0xff]
        %v721 = vld [vmem:[%s5 + $0x310] sm:$0xff]
        %v722 = vld [vmem:[%s5 + $0x32c] sm:$0xff]
        %v723 = vld [vmem:[%s5 + $0x348] sm:$0xff]
        %v724 = vld [vmem:[%s5 + $0x364] sm:$0xff]
        %v725 = vld [vmem:[%s6] sm:$0x3]
        %v727 = vlaneseq
        %v728 = vshrl.u32 %v727, 7
        %v729 = vsub.s32 0, %v728
        %v730 = vrot.slane %v725, %v729
        %v731 = vlaneseq
        %v732 = vshrl.u32 %v731, 7
        %v733 = vsub.s32 1, %v732
        %v734 = vrot.slane %v725, %v733
        %v769 = vunpack.c.l.b16 %v693
        %v770 = vunpack.c.h.b16 %v693
        %v771 = vunpack.c.l.b16 %v694
        %v772 = vunpack.c.h.b16 %v694
        %v773 = vunpack.c.l.b16 %v695
        %v774 = vunpack.c.h.b16 %v695
        %v775 = vunpack.c.l.b16 %v696
        %v776 = vunpack.c.h.b16 %v696
        %v777 = vunpack.c.l.b16 %v697
        %v778 = vunpack.c.h.b16 %v697
        %v779 = vunpack.c.l.b16 %v698
        %v780 = vunpack.c.h.b16 %v698
        %v781 = vunpack.c.l.b16 %v699
        %v782 = vunpack.c.h.b16 %v699
        %v783 = vunpack.c.l.b16 %v700
        %v784 = vunpack.c.h.b16 %v700
        %v785 = vunpack.c.l.b16 %v701
        %v786 = vunpack.c.h.b16 %v701
        %v787 = vunpack.c.l.b16 %v702
        %v788 = vunpack.c.h.b16 %v702
        %v789 = vunpack.c.l.b16 %v703
        %v790 = vunpack.c.h.b16 %v703
        %v791 = vunpack.c.l.b16 %v704
        %v792 = vunpack.c.h.b16 %v704
        %v793 = vunpack.c.l.b16 %v705
        %v794 = vunpack.c.h.b16 %v705
        %v795 = vunpack.c.l.b16 %v706
        %v796 = vunpack.c.h.b16 %v706
        %v797 = vunpack.c.l.b16 %v707
        %v798 = vunpack.c.h.b16 %v707
        %v799 = vunpack.c.l.b16 %v708
        %v800 = vunpack.c.h.b16 %v708
        %v801 = vunpack.c.l.b16 %v709
        %v802 = vunpack.c.h.b16 %v709
        %v803 = vunpack.c.l.b16 %v710
        %v804 = vunpack.c.h.b16 %v710
        %v805 = vunpack.c.l.b16 %v711
        %v806 = vunpack.c.h.b16 %v711
        %v807 = vunpack.c.l.b16 %v712
        %v808 = vunpack.c.h.b16 %v712
        %v809 = vunpack.c.l.b16 %v713
        %v810 = vunpack.c.h.b16 %v713
        %v811 = vunpack.c.l.b16 %v714
        %v812 = vunpack.c.h.b16 %v714
        %v813 = vunpack.c.l.b16 %v715
        %v814 = vunpack.c.h.b16 %v715
        %v815 = vunpack.c.l.b16 %v716
        %v816 = vunpack.c.h.b16 %v716
        %v817 = vunpack.c.l.b16 %v717
        %v818 = vunpack.c.h.b16 %v717
        %v819 = vunpack.c.l.b16 %v718
        %v820 = vunpack.c.h.b16 %v718
        %v821 = vunpack.c.l.b16 %v719
        %v822 = vunpack.c.h.b16 %v719
        %v823 = vunpack.c.l.b16 %v720
        %v824 = vunpack.c.h.b16 %v720
        %v825 = vunpack.c.l.b16 %v721
        %v826 = vunpack.c.h.b16 %v721
        %v827 = vunpack.c.l.b16 %v722
        %v828 = vunpack.c.h.b16 %v722
        %v829 = vunpack.c.l.b16 %v723
        %v830 = vunpack.c.h.b16 %v723
        %v831 = vunpack.c.l.b16 %v724
        %v832 = vunpack.c.h.b16 %v724
        %v833 = vpack.c.b16 %v771, %v769
        %v834 = vpack.c.b16 %v772, %v770
        %v835 = vpack.c.b16 %v775, %v773
        %v836 = vpack.c.b16 %v776, %v774
        %v837 = vpack.c.b16 %v779, %v777
        %v838 = vpack.c.b16 %v780, %v778
        %v839 = vpack.c.b16 %v783, %v781
        %v840 = vpack.c.b16 %v784, %v782
        %v841 = vpack.c.b16 %v787, %v785
        %v842 = vpack.c.b16 %v788, %v786
        %v843 = vpack.c.b16 %v791, %v789
        %v844 = vpack.c.b16 %v792, %v790
        %v845 = vpack.c.b16 %v795, %v793
        %v846 = vpack.c.b16 %v796, %v794
        %v847 = vpack.c.b16 %v799, %v797
        %v848 = vpack.c.b16 %v800, %v798
        %v849 = vpack.c.b16 %v803, %v801
        %v850 = vpack.c.b16 %v804, %v802
        %v851 = vpack.c.b16 %v807, %v805
        %v852 = vpack.c.b16 %v808, %v806
        %v853 = vpack.c.b16 %v811, %v809
        %v854 = vpack.c.b16 %v812, %v810
        %v855 = vpack.c.b16 %v815, %v813
        %v856 = vpack.c.b16 %v816, %v814
        %v857 = vpack.c.b16 %v819, %v817
        %v858 = vpack.c.b16 %v820, %v818
        %v859 = vpack.c.b16 %v823, %v821
        %v860 = vpack.c.b16 %v824, %v822
        %v861 = vpack.c.b16 %v827, %v825
        %v862 = vpack.c.b16 %v828, %v826
        %v863 = vpack.c.b16 %v831, %v829
        %v864 = vpack.c.b16 %v832, %v830
        %897 = vmatprep.subr.bf16.mxu0 %v834
        %898 = vmatpush1.bf16.msra.mxu0 %v833
        %899 = vmatprep.subr.bf16.mxu0 %v836
        %900 = vmatpush1.bf16.msra.mxu0 %v835
        %901 = vmatprep.subr.bf16.mxu0 %v838
        %902 = vmatpush1.bf16.msra.mxu0 %v837
        %903 = vmatprep.subr.bf16.mxu0 %v840
        %904 = vmatpush1.bf16.msra.mxu0 %v839
        %905 = vmatprep.subr.bf16.mxu0 %v842
        %906 = vmatpush1.bf16.msra.mxu0 %v841
        %907 = vmatprep.subr.bf16.mxu0 %v844
        %908 = vmatpush1.bf16.msra.mxu0 %v843
        %909 = vmatprep.subr.bf16.mxu0 %v846
        %910 = vmatpush1.bf16.msra.mxu0 %v845
        %911 = vmatprep.subr.bf16.mxu0 %v848
        %912 = vmatpush1.bf16.msra.mxu0 %v847
        %913 = vmatprep.subr.bf16.mxu0 %v850
        %914 = vmatpush1.bf16.msra.mxu0 %v849
        %915 = vmatprep.subr.bf16.mxu0 %v852
        %916 = vmatpush1.bf16.msra.mxu0 %v851
        %917 = vmatprep.subr.bf16.mxu0 %v854
        %918 = vmatpush1.bf16.msra.mxu0 %v853
        %919 = vmatprep.subr.bf16.mxu0 %v856
        %920 = vmatpush1.bf16.msra.mxu0 %v855
        %921 = vmatprep.subr.bf16.mxu0 %v858
        %922 = vmatpush1.bf16.msra.mxu0 %v857
        %923 = vmatprep.subr.bf16.mxu0 %v860
        %924 = vmatpush1.bf16.msra.mxu0 %v859
        %925 = vmatprep.subr.bf16.mxu0 %v862
        %926 = vmatpush1.bf16.msra.mxu0 %v861
        %927 = vmatprep.subr.bf16.mxu0 %v864
        %928 = vmatpush1.bf16.msra.mxu0 %v863
        %929 = vmatprep.mubr.bf16.mxu0 %v690
        %930 = vmatmul.mubr.bf16.gmra.mrb[0].mxu0 %v689
        %v931 = vpop.f32.mrb[0].mxu0
        %v932 = vadd.f32 %v730, %v931
        %v933 = vpop.f32.mrb[0].mxu0
        %v934 = vadd.f32 %v734, %v933
        %v935 = vpop.f32.mrb[0].mxu0
        %v936 = vadd.f32 %v730, %v935
        %v937 = vpop.f32.mrb[0].mxu0
        %v938 = vadd.f32 %v734, %v937
        %939 = vmatprep.mubr.bf16.mxu0 %v692
        %940 = vmatmul.mubr.bf16.gmra.mrb[0].mxu0 %v691
        %v941 = vpop.f32.mrb[0].mxu0
        %v942 = vadd.f32 %v730, %v941
        %v943 = vpop.f32.mrb[0].mxu0
        %v944 = vadd.f32 %v734, %v943
        %v945 = vpop.f32.mrb[0].mxu0
        %v946 = vadd.f32 %v730, %v945
        %v947 = vpop.f32.mrb[0].mxu0
        %v948 = vadd.f32 %v734, %v947
        %949 = vdwg.mxu0
        %v950 = vtanh.pop %v932
        %v951 = vtanh.pop %v934
        %v952 = vtanh.pop %v936
        %v953 = vtanh.pop %v938
        %v954 = vtanh.pop %v942
        %v955 = vtanh.pop %v944
        %v956 = vtanh.pop %v946
        %v957 = vtanh.pop %v948
        %v958 = vpack.c.bf16 %v952, %v950
        %v959 = vpack.c.bf16 %v953, %v951
        %v960 = vpack.c.bf16 %v956, %v954
        %v961 = vpack.c.bf16 %v957, %v955
        %v966 = vunpack.c.l.b16 %v958
        %v967 = vunpack.c.l.b16 %v959
        %v968 = vunpack.c.h.b16 %v958
        %v969 = vunpack.c.h.b16 %v959
        %v970 = vunpack.c.l.b16 %v960
        %v971 = vunpack.c.l.b16 %v961
        %v972 = vunpack.c.h.b16 %v960
        %v973 = vunpack.c.h.b16 %v961
        %v974 = vpack.c.b16 %v967, %v966
        %v975 = vpack.c.b16 %v969, %v968
        %v976 = vpack.c.b16 %v971, %v970
        %v977 = vpack.c.b16 %v973, %v972
        %982 = vst [vmem:[%s272] sm:$0xff] %v974
        %983 = vst [vmem:[%s272 + $0x1c] sm:$0xff] %v975
        %984 = vst [vmem:[%s272 + $0x38] sm:$0xff] %v976
        %985 = vst [vmem:[%s272 + $0x54] sm:$0xff] %v977
        %v986 = vld [vmem:[%s5 + $0x8] sm:$0xff]
        %v987 = vld [vmem:[%s5 + $0x24] sm:$0xff]
        %v988 = vld [vmem:[%s5 + $0x40] sm:$0xff]
        %v989 = vld [vmem:[%s5 + $0x5c] sm:$0xff]
        %v990 = vld [vmem:[%s5 + $0x78] sm:$0xff]
        %v991 = vld [vmem:[%s5 + $0x94] sm:$0xff]
        %v992 = vld [vmem:[%s5 + $0xb0] sm:$0xff]
        %v993 = vld [vmem:[%s5 + $0xcc] sm:$0xff]
        %v994 = vld [vmem:[%s5 + $0xe8] sm:$0xff]
        %v995 = vld [vmem:[%s5 + $0x104] sm:$0xff]
        %v996 = vld [vmem:[%s5 + $0x120] sm:$0xff]
        %v997 = vld [vmem:[%s5 + $0x13c] sm:$0xff]
        %v998 = vld [vmem:[%s5 + $0x158] sm:$0xff]
        %v999 = vld [vmem:[%s5 + $0x174] sm:$0xff]
        %v1000 = vld [vmem:[%s5 + $0x190] sm:$0xff]
        %v1001 = vld [vmem:[%s5 + $0x1ac] sm:$0xff]
        %v1002 = vld [vmem:[%s5 + $0x1c8] sm:$0xff]
        %v1003 = vld [vmem:[%s5 + $0x1e4] sm:$0xff]
        %v1004 = vld [vmem:[%s5 + $0x200] sm:$0xff]
        %v1005 = vld [vmem:[%s5 + $0x21c] sm:$0xff]
        %v1006 = vld [vmem:[%s5 + $0x238] sm:$0xff]
        %v1007 = vld [vmem:[%s5 + $0x254] sm:$0xff]
        %v1008 = vld [vmem:[%s5 + $0x270] sm:$0xff]
        %v1009 = vld [vmem:[%s5 + $0x28c] sm:$0xff]
        %v1010 = vld [vmem:[%s5 + $0x2a8] sm:$0xff]
        %v1011 = vld [vmem:[%s5 + $0x2c4] sm:$0xff]
        %v1012 = vld [vmem:[%s5 + $0x2e0] sm:$0xff]
        %v1013 = vld [vmem:[%s5 + $0x2fc] sm:$0xff]
        %v1014 = vld [vmem:[%s5 + $0x318] sm:$0xff]
        %v1015 = vld [vmem:[%s5 + $0x334] sm:$0xff]
        %v1016 = vld [vmem:[%s5 + $0x350] sm:$0xff]
        %v1017 = vld [vmem:[%s5 + $0x36c] sm:$0xff]
        %v1018 = vld [vmem:[%s6 + $0x2] sm:$0x3]
        %v1020 = vlaneseq
        %v1021 = vshrl.u32 %v1020, 7
        %v1022 = vsub.s32 0, %v1021
        %v1023 = vrot.slane %v1018, %v1022
        %v1024 = vlaneseq
        %v1025 = vshrl.u32 %v1024, 7
        %v1026 = vsub.s32 1, %v1025
        %v1027 = vrot.slane %v1018, %v1026
        %v1062 = vunpack.c.l.b16 %v986
        %v1063 = vunpack.c.h.b16 %v986
        %v1064 = vunpack.c.l.b16 %v987
        %v1065 = vunpack.c.h.b16 %v987
        %v1066 = vunpack.c.l.b16 %v988
        %v1067 = vunpack.c.h.b16 %v988
        %v1068 = vunpack.c.l.b16 %v989
        %v1069 = vunpack.c.h.b16 %v989
        %v1070 = vunpack.c.l.b16 %v990
        %v1071 = vunpack.c.h.b16 %v990
        %v1072 = vunpack.c.l.b16 %v991
        %v1073 = vunpack.c.h.b16 %v991
        %v1074 = vunpack.c.l.b16 %v992
        %v1075 = vunpack.c.h.b16 %v992
        %v1076 = vunpack.c.l.b16 %v993
        %v1077 = vunpack.c.h.b16 %v993
        %v1078 = vunpack.c.l.b16 %v994
        %v1079 = vunpack.c.h.b16 %v994
        %v1080 = vunpack.c.l.b16 %v995
        %v1081 = vunpack.c.h.b16 %v995
        %v1082 = vunpack.c.l.b16 %v996
        %v1083 = vunpack.c.h.b16 %v996
        %v1084 = vunpack.c.l.b16 %v997
        %v1085 = vunpack.c.h.b16 %v997
        %v1086 = vunpack.c.l.b16 %v998
        %v1087 = vunpack.c.h.b16 %v998
        %v1088 = vunpack.c.l.b16 %v999
        %v1089 = vunpack.c.h.b16 %v999
        %v1090 = vunpack.c.l.b16 %v1000
        %v1091 = vunpack.c.h.b16 %v1000
        %v1092 = vunpack.c.l.b16 %v1001
        %v1093 = vunpack.c.h.b16 %v1001
        %v1094 = vunpack.c.l.b16 %v1002
        %v1095 = vunpack.c.h.b16 %v1002
        %v1096 = vunpack.c.l.b16 %v1003
        %v1097 = vunpack.c.h.b16 %v1003
        %v1098 = vunpack.c.l.b16 %v1004
        %v1099 = vunpack.c.h.b16 %v1004
        %v1100 = vunpack.c.l.b16 %v1005
        %v1101 = vunpack.c.h.b16 %v1005
        %v1102 = vunpack.c.l.b16 %v1006
        %v1103 = vunpack.c.h.b16 %v1006
        %v1104 = vunpack.c.l.b16 %v1007
        %v1105 = vunpack.c.h.b16 %v1007
        %v1106 = vunpack.c.l.b16 %v1008
        %v1107 = vunpack.c.h.b16 %v1008
        %v1108 = vunpack.c.l.b16 %v1009
        %v1109 = vunpack.c.h.b16 %v1009
        %v1110 = vunpack.c.l.b16 %v1010
        %v1111 = vunpack.c.h.b16 %v1010
        %v1112 = vunpack.c.l.b16 %v1011
        %v1113 = vunpack.c.h.b16 %v1011
        %v1114 = vunpack.c.l.b16 %v1012
        %v1115 = vunpack.c.h.b16 %v1012
        %v1116 = vunpack.c.l.b16 %v1013
        %v1117 = vunpack.c.h.b16 %v1013
        %v1118 = vunpack.c.l.b16 %v1014
        %v1119 = vunpack.c.h.b16 %v1014
        %v1120 = vunpack.c.l.b16 %v1015
        %v1121 = vunpack.c.h.b16 %v1015
        %v1122 = vunpack.c.l.b16 %v1016
        %v1123 = vunpack.c.h.b16 %v1016
        %v1124 = vunpack.c.l.b16 %v1017
        %v1125 = vunpack.c.h.b16 %v1017
        %v1126 = vpack.c.b16 %v1064, %v1062
        %v1127 = vpack.c.b16 %v1065, %v1063
        %v1128 = vpack.c.b16 %v1068, %v1066
        %v1129 = vpack.c.b16 %v1069, %v1067
        %v1130 = vpack.c.b16 %v1072, %v1070
        %v1131 = vpack.c.b16 %v1073, %v1071
        %v1132 = vpack.c.b16 %v1076, %v1074
        %v1133 = vpack.c.b16 %v1077, %v1075
        %v1134 = vpack.c.b16 %v1080, %v1078
        %v1135 = vpack.c.b16 %v1081, %v1079
        %v1136 = vpack.c.b16 %v1084, %v1082
        %v1137 = vpack.c.b16 %v1085, %v1083
        %v1138 = vpack.c.b16 %v1088, %v1086
        %v1139 = vpack.c.b16 %v1089, %v1087
        %v1140 = vpack.c.b16 %v1092, %v1090
        %v1141 = vpack.c.b16 %v1093, %v1091
        %v1142 = vpack.c.b16 %v1096, %v1094
        %v1143 = vpack.c.b16 %v1097, %v1095
        %v1144 = vpack.c.b16 %v1100, %v1098
        %v1145 = vpack.c.b16 %v1101, %v1099
        %v1146 = vpack.c.b16 %v1104, %v1102
        %v1147 = vpack.c.b16 %v1105, %v1103
        %v1148 = vpack.c.b16 %v1108, %v1106
        %v1149 = vpack.c.b16 %v1109, %v1107
        %v1150 = vpack.c.b16 %v1112, %v1110
        %v1151 = vpack.c.b16 %v1113, %v1111
        %v1152 = vpack.c.b16 %v1116, %v1114
        %v1153 = vpack.c.b16 %v1117, %v1115
        %v1154 = vpack.c.b16 %v1120, %v1118
        %v1155 = vpack.c.b16 %v1121, %v1119
        %v1156 = vpack.c.b16 %v1124, %v1122
        %v1157 = vpack.c.b16 %v1125, %v1123
        %1190 = vmatprep.subr.bf16.mxu0 %v1127
        %1191 = vmatpush1.bf16.msra.mxu0 %v1126
        %1192 = vmatprep.subr.bf16.mxu0 %v1129
        %1193 = vmatpush1.bf16.msra.mxu0 %v1128
        %1194 = vmatprep.subr.bf16.mxu0 %v1131
        %1195 = vmatpush1.bf16.msra.mxu0 %v1130
        %1196 = vmatprep.subr.bf16.mxu0 %v1133
        %1197 = vmatpush1.bf16.msra.mxu0 %v1132
        %1198 = vmatprep.subr.bf16.mxu0 %v1135
        %1199 = vmatpush1.bf16.msra.mxu0 %v1134
        %1200 = vmatprep.subr.bf16.mxu0 %v1137
        %1201 = vmatpush1.bf16.msra.mxu0 %v1136
        %1202 = vmatprep.subr.bf16.mxu0 %v1139
        %1203 = vmatpush1.bf16.msra.mxu0 %v1138
        %1204 = vmatprep.subr.bf16.mxu0 %v1141
        %1205 = vmatpush1.bf16.msra.mxu0 %v1140
        %1206 = vmatprep.subr.bf16.mxu0 %v1143
        %1207 = vmatpush1.bf16.msra.mxu0 %v1142
        %1208 = vmatprep.subr.bf16.mxu0 %v1145
        %1209 = vmatpush1.bf16.msra.mxu0 %v1144
        %1210 = vmatprep.subr.bf16.mxu0 %v1147
        %1211 = vmatpush1.bf16.msra.mxu0 %v1146
        %1212 = vmatprep.subr.bf16.mxu0 %v1149
        %1213 = vmatpush1.bf16.msra.mxu0 %v1148
        %1214 = vmatprep.subr.bf16.mxu0 %v1151
        %1215 = vmatpush1.bf16.msra.mxu0 %v1150
        %1216 = vmatprep.subr.bf16.mxu0 %v1153
        %1217 = vmatpush1.bf16.msra.mxu0 %v1152
        %1218 = vmatprep.subr.bf16.mxu0 %v1155
        %1219 = vmatpush1.bf16.msra.mxu0 %v1154
        %1220 = vmatprep.subr.bf16.mxu0 %v1157
        %1221 = vmatpush1.bf16.msra.mxu0 %v1156
        %1222 = vmatprep.mubr.bf16.mxu0 %v690
        %1223 = vmatmul.mubr.bf16.gmra.mrb[0].mxu0 %v689
        %v1224 = vpop.f32.mrb[0].mxu0
        %v1225 = vadd.f32 %v1023, %v1224
        %v1226 = vpop.f32.mrb[0].mxu0
        %v1227 = vadd.f32 %v1027, %v1226
        %v1228 = vpop.f32.mrb[0].mxu0
        %v1229 = vadd.f32 %v1023, %v1228
        %v1230 = vpop.f32.mrb[0].mxu0
        %v1231 = vadd.f32 %v1027, %v1230
        %1232 = vmatprep.mubr.bf16.mxu0 %v692
        %1233 = vmatmul.mubr.bf16.gmra.mrb[0].mxu0 %v691
        %v1234 = vpop.f32.mrb[0].mxu0
        %v1235 = vadd.f32 %v1023, %v1234
        %v1236 = vpop.f32.mrb[0].mxu0
        %v1237 = vadd.f32 %v1027, %v1236
        %v1238 = vpop.f32.mrb[0].mxu0
        %v1239 = vadd.f32 %v1023, %v1238
        %v1240 = vpop.f32.mrb[0].mxu0
        %v1241 = vadd.f32 %v1027, %v1240
        %1242 = vdwg.mxu0
        %v1243 = vtanh.pop %v1225
        %v1244 = vtanh.pop %v1227
        %v1245 = vtanh.pop %v1229
        %v1246 = vtanh.pop %v1231
        %v1247 = vtanh.pop %v1235
        %v1248 = vtanh.pop %v1237
        %v1249 = vtanh.pop %v1239
        %v1250 = vtanh.pop %v1241
        %v1251 = vpack.c.bf16 %v1245, %v1243
        %v1252 = vpack.c.bf16 %v1246, %v1244
        %v1253 = vpack.c.bf16 %v1249, %v1247
        %v1254 = vpack.c.bf16 %v1250, %v1248
        %v1259 = vunpack.c.l.b16 %v1251
        %v1260 = vunpack.c.l.b16 %v1252
        %v1261 = vunpack.c.h.b16 %v1251
        %v1262 = vunpack.c.h.b16 %v1252
        %v1263 = vunpack.c.l.b16 %v1253
        %v1264 = vunpack.c.l.b16 %v1254
        %v1265 = vunpack.c.h.b16 %v1253
        %v1266 = vunpack.c.h.b16 %v1254
        %v1267 = vpack.c.b16 %v1260, %v1259
        %v1268 = vpack.c.b16 %v1262, %v1261
        %v1269 = vpack.c.b16 %v1264, %v1263
        %v1270 = vpack.c.b16 %v1266, %v1265
        %1275 = vst [vmem:[%s272 + $0x8] sm:$0xff] %v1267
        %1276 = vst [vmem:[%s272 + $0x24] sm:$0xff] %v1268
        %1277 = vst [vmem:[%s272 + $0x40] sm:$0xff] %v1269
        %1278 = vst [vmem:[%s272 + $0x5c] sm:$0xff] %v1270
        %v1279 = vld [vmem:[%s5 + $0x10] sm:$0xff]
        %v1280 = vld [vmem:[%s5 + $0x2c] sm:$0xff]
        %v1281 = vld [vmem:[%s5 + $0x48] sm:$0xff]
        %v1282 = vld [vmem:[%s5 + $0x64] sm:$0xff]
        %v1283 = vld [vmem:[%s5 + $0x80] sm:$0xff]
        %v1284 = vld [vmem:[%s5 + $0x9c] sm:$0xff]
        %v1285 = vld [vmem:[%s5 + $0xb8] sm:$0xff]
        %v1286 = vld [vmem:[%s5 + $0xd4] sm:$0xff]
        %v1287 = vld [vmem:[%s5 + $0xf0] sm:$0xff]
        %v1288 = vld [vmem:[%s5 + $0x10c] sm:$0xff]
        %v1289 = vld [vmem:[%s5 + $0x128] sm:$0xff]
        %v1290 = vld [vmem:[%s5 + $0x144] sm:$0xff]
        %v1291 = vld [vmem:[%s5 + $0x160] sm:$0xff]
        %v1292 = vld [vmem:[%s5 + $0x17c] sm:$0xff]
        %v1293 = vld [vmem:[%s5 + $0x198] sm:$0xff]
        %v1294 = vld [vmem:[%s5 + $0x1b4] sm:$0xff]
        %v1295 = vld [vmem:[%s5 + $0x1d0] sm:$0xff]
        %v1296 = vld [vmem:[%s5 + $0x1ec] sm:$0xff]
        %v1297 = vld [vmem:[%s5 + $0x208] sm:$0xff]
        %v1298 = vld [vmem:[%s5 + $0x224] sm:$0xff]
        %v1299 = vld [vmem:[%s5 + $0x240] sm:$0xff]
        %v1300 = vld [vmem:[%s5 + $0x25c] sm:$0xff]
        %v1301 = vld [vmem:[%s5 + $0x278] sm:$0xff]
        %v1302 = vld [vmem:[%s5 + $0x294] sm:$0xff]
        %v1303 = vld [vmem:[%s5 + $0x2b0] sm:$0xff]
        %v1304 = vld [vmem:[%s5 + $0x2cc] sm:$0xff]
        %v1305 = vld [vmem:[%s5 + $0x2e8] sm:$0xff]
        %v1306 = vld [vmem:[%s5 + $0x304] sm:$0xff]
        %v1307 = vld [vmem:[%s5 + $0x320] sm:$0xff]
        %v1308 = vld [vmem:[%s5 + $0x33c] sm:$0xff]
        %v1309 = vld [vmem:[%s5 + $0x358] sm:$0xff]
        %v1310 = vld [vmem:[%s5 + $0x374] sm:$0xff]
        %v1311 = vld [vmem:[%s6 + $0x4] sm:$0x3]
        %v1313 = vlaneseq
        %v1314 = vshrl.u32 %v1313, 7
        %v1315 = vsub.s32 0, %v1314
        %v1316 = vrot.slane %v1311, %v1315
        %v1317 = vlaneseq
        %v1318 = vshrl.u32 %v1317, 7
        %v1319 = vsub.s32 1, %v1318
        %v1320 = vrot.slane %v1311, %v1319
        %v1355 = vunpack.c.l.b16 %v1279
        %v1356 = vunpack.c.h.b16 %v1279
        %v1357 = vunpack.c.l.b16 %v1280
        %v1358 = vunpack.c.h.b16 %v1280
        %v1359 = vunpack.c.l.b16 %v1281
        %v1360 = vunpack.c.h.b16 %v1281
        %v1361 = vunpack.c.l.b16 %v1282
        %v1362 = vunpack.c.h.b16 %v1282
        %v1363 = vunpack.c.l.b16 %v1283
        %v1364 = vunpack.c.h.b16 %v1283
        %v1365 = vunpack.c.l.b16 %v1284
        %v1366 = vunpack.c.h.b16 %v1284
        %v1367 = vunpack.c.l.b16 %v1285
        %v1368 = vunpack.c.h.b16 %v1285
        %v1369 = vunpack.c.l.b16 %v1286
        %v1370 = vunpack.c.h.b16 %v1286
        %v1371 = vunpack.c.l.b16 %v1287
        %v1372 = vunpack.c.h.b16 %v1287
        %v1373 = vunpack.c.l.b16 %v1288
        %v1374 = vunpack.c.h.b16 %v1288
        %v1375 = vunpack.c.l.b16 %v1289
        %v1376 = vunpack.c.h.b16 %v1289
        %v1377 = vunpack.c.l.b16 %v1290
        %v1378 = vunpack.c.h.b16 %v1290
        %v1379 = vunpack.c.l.b16 %v1291
        %v1380 = vunpack.c.h.b16 %v1291
        %v1381 = vunpack.c.l.b16 %v1292
        %v1382 = vunpack.c.h.b16 %v1292
        %v1383 = vunpack.c.l.b16 %v1293
        %v1384 = vunpack.c.h.b16 %v1293
        %v1385 = vunpack.c.l.b16 %v1294
        %v1386 = vunpack.c.h.b16 %v1294
        %v1387 = vunpack.c.l.b16 %v1295
        %v1388 = vunpack.c.h.b16 %v1295
        %v1389 = vunpack.c.l.b16 %v1296
        %v1390 = vunpack.c.h.b16 %v1296
        %v1391 = vunpack.c.l.b16 %v1297
        %v1392 = vunpack.c.h.b16 %v1297
        %v1393 = vunpack.c.l.b16 %v1298
        %v1394 = vunpack.c.h.b16 %v1298
        %v1395 = vunpack.c.l.b16 %v1299
        %v1396 = vunpack.c.h.b16 %v1299
        %v1397 = vunpack.c.l.b16 %v1300
        %v1398 = vunpack.c.h.b16 %v1300
        %v1399 = vunpack.c.l.b16 %v1301
        %v1400 = vunpack.c.h.b16 %v1301
        %v1401 = vunpack.c.l.b16 %v1302
        %v1402 = vunpack.c.h.b16 %v1302
        %v1403 = vunpack.c.l.b16 %v1303
        %v1404 = vunpack.c.h.b16 %v1303
        %v1405 = vunpack.c.l.b16 %v1304
        %v1406 = vunpack.c.h.b16 %v1304
        %v1407 = vunpack.c.l.b16 %v1305
        %v1408 = vunpack.c.h.b16 %v1305
        %v1409 = vunpack.c.l.b16 %v1306
        %v1410 = vunpack.c.h.b16 %v1306
        %v1411 = vunpack.c.l.b16 %v1307
        %v1412 = vunpack.c.h.b16 %v1307
        %v1413 = vunpack.c.l.b16 %v1308
        %v1414 = vunpack.c.h.b16 %v1308
        %v1415 = vunpack.c.l.b16 %v1309
        %v1416 = vunpack.c.h.b16 %v1309
        %v1417 = vunpack.c.l.b16 %v1310
        %v1418 = vunpack.c.h.b16 %v1310
        %v1419 = vpack.c.b16 %v1357, %v1355
        %v1420 = vpack.c.b16 %v1358, %v1356
        %v1421 = vpack.c.b16 %v1361, %v1359
        %v1422 = vpack.c.b16 %v1362, %v1360
        %v1423 = vpack.c.b16 %v1365, %v1363
        %v1424 = vpack.c.b16 %v1366, %v1364
        %v1425 = vpack.c.b16 %v1369, %v1367
        %v1426 = vpack.c.b16 %v1370, %v1368
        %v1427 = vpack.c.b16 %v1373, %v1371
        %v1428 = vpack.c.b16 %v1374, %v1372
        %v1429 = vpack.c.b16 %v1377, %v1375
        %v1430 = vpack.c.b16 %v1378, %v1376
        %v1431 = vpack.c.b16 %v1381, %v1379
        %v1432 = vpack.c.b16 %v1382, %v1380
        %v1433 = vpack.c.b16 %v1385, %v1383
        %v1434 = vpack.c.b16 %v1386, %v1384
        %v1435 = vpack.c.b16 %v1389, %v1387
        %v1436 = vpack.c.b16 %v1390, %v1388
        %v1437 = vpack.c.b16 %v1393, %v1391
        %v1438 = vpack.c.b16 %v1394, %v1392
        %v1439 = vpack.c.b16 %v1397, %v1395
        %v1440 = vpack.c.b16 %v1398, %v1396
        %v1441 = vpack.c.b16 %v1401, %v1399
        %v1442 = vpack.c.b16 %v1402, %v1400
        %v1443 = vpack.c.b16 %v1405, %v1403
        %v1444 = vpack.c.b16 %v1406, %v1404
        %v1445 = vpack.c.b16 %v1409, %v1407
        %v1446 = vpack.c.b16 %v1410, %v1408
        %v1447 = vpack.c.b16 %v1413, %v1411
        %v1448 = vpack.c.b16 %v1414, %v1412
        %v1449 = vpack.c.b16 %v1417, %v1415
        %v1450 = vpack.c.b16 %v1418, %v1416
        %1483 = vmatprep.subr.bf16.mxu0 %v1420
        %1484 = vmatpush1.bf16.msra.mxu0 %v1419
        %1485 = vmatprep.subr.bf16.mxu0 %v1422
        %1486 = vmatpush1.bf16.msra.mxu0 %v1421
        %1487 = vmatprep.subr.bf16.mxu0 %v1424
        %1488 = vmatpush1.bf16.msra.mxu0 %v1423
        %1489 = vmatprep.subr.bf16.mxu0 %v1426
        %1490 = vmatpush1.bf16.msra.mxu0 %v1425
        %1491 = vmatprep.subr.bf16.mxu0 %v1428
        %1492 = vmatpush1.bf16.msra.mxu0 %v1427
        %1493 = vmatprep.subr.bf16.mxu0 %v1430
        %1494 = vmatpush1.bf16.msra.mxu0 %v1429
        %1495 = vmatprep.subr.bf16.mxu0 %v1432
        %1496 = vmatpush1.bf16.msra.mxu0 %v1431
        %1497 = vmatprep.subr.bf16.mxu0 %v1434
        %1498 = vmatpush1.bf16.msra.mxu0 %v1433
        %1499 = vmatprep.subr.bf16.mxu0 %v1436
        %1500 = vmatpush1.bf16.msra.mxu0 %v1435
        %1501 = vmatprep.subr.bf16.mxu0 %v1438
        %1502 = vmatpush1.bf16.msra.mxu0 %v1437
        %1503 = vmatprep.subr.bf16.mxu0 %v1440
        %1504 = vmatpush1.bf16.msra.mxu0 %v1439
        %1505 = vmatprep.subr.bf16.mxu0 %v1442
        %1506 = vmatpush1.bf16.msra.mxu0 %v1441
        %1507 = vmatprep.subr.bf16.mxu0 %v1444
        %1508 = vmatpush1.bf16.msra.mxu0 %v1443
        %1509 = vmatprep.subr.bf16.mxu0 %v1446
        %1510 = vmatpush1.bf16.msra.mxu0 %v1445
        %1511 = vmatprep.subr.bf16.mxu0 %v1448
        %1512 = vmatpush1.bf16.msra.mxu0 %v1447
        %1513 = vmatprep.subr.bf16.mxu0 %v1450
        %1514 = vmatpush1.bf16.msra.mxu0 %v1449
        %1515 = vmatprep.mubr.bf16.mxu0 %v690
        %1516 = vmatmul.mubr.bf16.gmra.mrb[0].mxu0 %v689
        %v1517 = vpop.f32.mrb[0].mxu0
        %v1518 = vadd.f32 %v1316, %v1517
        %v1519 = vpop.f32.mrb[0].mxu0
        %v1520 = vadd.f32 %v1320, %v1519
        %v1521 = vpop.f32.mrb[0].mxu0
        %v1522 = vadd.f32 %v1316, %v1521
        %v1523 = vpop.f32.mrb[0].mxu0
        %v1524 = vadd.f32 %v1320, %v1523
        %1525 = vmatprep.mubr.bf16.mxu0 %v692
        %1526 = vmatmul.mubr.bf16.gmra.mrb[0].mxu0 %v691
        %v1527 = vpop.f32.mrb[0].mxu0
        %v1528 = vadd.f32 %v1316, %v1527
        %v1529 = vpop.f32.mrb[0].mxu0
        %v1530 = vadd.f32 %v1320, %v1529
        %v1531 = vpop.f32.mrb[0].mxu0
        %v1532 = vadd.f32 %v1316, %v1531
        %v1533 = vpop.f32.mrb[0].mxu0
        %v1534 = vadd.f32 %v1320, %v1533
        %1535 = vdwg.mxu0
        %v1536 = vtanh.pop %v1518
        %v1537 = vtanh.pop %v1520
        %v1538 = vtanh.pop %v1522
        %v1539 = vtanh.pop %v1524
        %v1540 = vtanh.pop %v1528
        %v1541 = vtanh.pop %v1530
        %v1542 = vtanh.pop %v1532
        %v1543 = vtanh.pop %v1534
        %v1544 = vpack.c.bf16 %v1538, %v1536
        %v1545 = vpack.c.bf16 %v1539, %v1537
        %v1546 = vpack.c.bf16 %v1542, %v1540
        %v1547 = vpack.c.bf16 %v1543, %v1541
        %v1552 = vunpack.c.l.b16 %v1544
        %v1553 = vunpack.c.l.b16 %v1545
        %v1554 = vunpack.c.h.b16 %v1544
        %v1555 = vunpack.c.h.b16 %v1545
        %v1556 = vunpack.c.l.b16 %v1546
        %v1557 = vunpack.c.l.b16 %v1547
        %v1558 = vunpack.c.h.b16 %v1546
        %v1559 = vunpack.c.h.b16 %v1547
        %v1560 = vpack.c.b16 %v1553, %v1552
        %v1561 = vpack.c.b16 %v1555, %v1554
        %v1562 = vpack.c.b16 %v1557, %v1556
        %v1563 = vpack.c.b16 %v1559, %v1558
        %1568 = vst [vmem:[%s272 + $0x10] sm:$0xff] %v1560
        %1569 = vst [vmem:[%s272 + $0x2c] sm:$0xff] %v1561
        %1570 = vst [vmem:[%s272 + $0x48] sm:$0xff] %v1562
        %1571 = vst [vmem:[%s272 + $0x64] sm:$0xff] %v1563
        %v1572 = vld [vmem:[%s5 + $0x18] sm:$0xf]
        %v1573 = vld [vmem:[%s5 + $0x34] sm:$0xf]
        %v1574 = vld [vmem:[%s5 + $0x50] sm:$0xf]
        %v1575 = vld [vmem:[%s5 + $0x6c] sm:$0xf]
        %v1576 = vld [vmem:[%s5 + $0x88] sm:$0xf]
        %v1577 = vld [vmem:[%s5 + $0xa4] sm:$0xf]
        %v1578 = vld [vmem:[%s5 + $0xc0] sm:$0xf]
        %v1579 = vld [vmem:[%s5 + $0xdc] sm:$0xf]
        %v1580 = vld [vmem:[%s5 + $0xf8] sm:$0xf]
        %v1581 = vld [vmem:[%s5 + $0x114] sm:$0xf]
        %v1582 = vld [vmem:[%s5 + $0x130] sm:$0xf]
        %v1583 = vld [vmem:[%s5 + $0x14c] sm:$0xf]
        %v1584 = vld [vmem:[%s5 + $0x168] sm:$0xf]
        %v1585 = vld [vmem:[%s5 + $0x184] sm:$0xf]
        %v1586 = vld [vmem:[%s5 + $0x1a0] sm:$0xf]
        %v1587 = vld [vmem:[%s5 + $0x1bc] sm:$0xf]
        %v1588 = vld [vmem:[%s5 + $0x1d8] sm:$0xf]
        %v1589 = vld [vmem:[%s5 + $0x1f4] sm:$0xf]
        %v1590 = vld [vmem:[%s5 + $0x210] sm:$0xf]
        %v1591 = vld [vmem:[%s5 + $0x22c] sm:$0xf]
        %v1592 = vld [vmem:[%s5 + $0x248] sm:$0xf]
        %v1593 = vld [vmem:[%s5 + $0x264] sm:$0xf]
        %v1594 = vld [vmem:[%s5 + $0x280] sm:$0xf]
        %v1595 = vld [vmem:[%s5 + $0x29c] sm:$0xf]
        %v1596 = vld [vmem:[%s5 + $0x2b8] sm:$0xf]
        %v1597 = vld [vmem:[%s5 + $0x2d4] sm:$0xf]
        %v1598 = vld [vmem:[%s5 + $0x2f0] sm:$0xf]
        %v1599 = vld [vmem:[%s5 + $0x30c] sm:$0xf]
        %v1600 = vld [vmem:[%s5 + $0x328] sm:$0xf]
        %v1601 = vld [vmem:[%s5 + $0x344] sm:$0xf]
        %v1602 = vld [vmem:[%s5 + $0x360] sm:$0xf]
        %v1603 = vld [vmem:[%s5 + $0x37c] sm:$0xf]
        %v1604 = vld [vmem:[%s6 + $0x6] sm:$0x1]
        %v1606 = vlaneseq
        %v1607 = vshrl.u32 %v1606, 7
        %v1608 = vsub.s32 0, %v1607
        %v1609 = vrot.slane %v1604, %v1608
        %v1643 = vunpack.c.l.b16 %v1572
        %v1644 = vunpack.c.l.b16 %v1573
        %v1645 = vunpack.c.l.b16 %v1574
        %v1646 = vunpack.c.l.b16 %v1575
        %v1647 = vunpack.c.l.b16 %v1576
        %v1648 = vunpack.c.l.b16 %v1577
        %v1649 = vunpack.c.l.b16 %v1578
        %v1650 = vunpack.c.l.b16 %v1579
        %v1651 = vunpack.c.l.b16 %v1580
        %v1652 = vunpack.c.l.b16 %v1581
        %v1653 = vunpack.c.l.b16 %v1582
        %v1654 = vunpack.c.l.b16 %v1583
        %v1655 = vunpack.c.l.b16 %v1584
        %v1656 = vunpack.c.l.b16 %v1585
        %v1657 = vunpack.c.l.b16 %v1586
        %v1658 = vunpack.c.l.b16 %v1587
        %v1659 = vunpack.c.l.b16 %v1588
        %v1660 = vunpack.c.l.b16 %v1589
        %v1661 = vunpack.c.l.b16 %v1590
        %v1662 = vunpack.c.l.b16 %v1591
        %v1663 = vunpack.c.l.b16 %v1592
        %v1664 = vunpack.c.l.b16 %v1593
        %v1665 = vunpack.c.l.b16 %v1594
        %v1666 = vunpack.c.l.b16 %v1595
        %v1667 = vunpack.c.l.b16 %v1596
        %v1668 = vunpack.c.l.b16 %v1597
        %v1669 = vunpack.c.l.b16 %v1598
        %v1670 = vunpack.c.l.b16 %v1599
        %v1671 = vunpack.c.l.b16 %v1600
        %v1672 = vunpack.c.l.b16 %v1601
        %v1673 = vunpack.c.l.b16 %v1602
        %v1674 = vunpack.c.l.b16 %v1603
        %v1675 = vpack.c.b16 %v1644, %v1643
        %v1676 = vpack.c.b16 %v1646, %v1645
        %v1677 = vpack.c.b16 %v1648, %v1647
        %v1678 = vpack.c.b16 %v1650, %v1649
        %v1679 = vpack.c.b16 %v1652, %v1651
        %v1680 = vpack.c.b16 %v1654, %v1653
        %v1681 = vpack.c.b16 %v1656, %v1655
        %v1682 = vpack.c.b16 %v1658, %v1657
        %v1683 = vpack.c.b16 %v1660, %v1659
        %v1684 = vpack.c.b16 %v1662, %v1661
        %v1685 = vpack.c.b16 %v1664, %v1663
        %v1686 = vpack.c.b16 %v1666, %v1665
        %v1687 = vpack.c.b16 %v1668, %v1667
        %v1688 = vpack.c.b16 %v1670, %v1669
        %v1689 = vpack.c.b16 %v1672, %v1671
        %v1690 = vpack.c.b16 %v1674, %v1673
        %1707 = vmatprep.subr.bf16.mxu0 0
        %1708 = vmatpush1.bf16.msra.mxu0 %v1675
        %1709 = vmatprep.subr.bf16.mxu0 0
        %1710 = vmatpush1.bf16.msra.mxu0 %v1676
        %1711 = vmatprep.subr.bf16.mxu0 0
        %1712 = vmatpush1.bf16.msra.mxu0 %v1677
        %1713 = vmatprep.subr.bf16.mxu0 0
        %1714 = vmatpush1.bf16.msra.mxu0 %v1678
        %1715 = vmatprep.subr.bf16.mxu0 0
        %1716 = vmatpush1.bf16.msra.mxu0 %v1679
        %1717 = vmatprep.subr.bf16.mxu0 0
        %1718 = vmatpush1.bf16.msra.mxu0 %v1680
        %1719 = vmatprep.subr.bf16.mxu0 0
        %1720 = vmatpush1.bf16.msra.mxu0 %v1681
        %1721 = vmatprep.subr.bf16.mxu0 0
        %1722 = vmatpush1.bf16.msra.mxu0 %v1682
        %1723 = vmatprep.subr.bf16.mxu0 0
        %1724 = vmatpush1.bf16.msra.mxu0 %v1683
        %1725 = vmatprep.subr.bf16.mxu0 0
        %1726 = vmatpush1.bf16.msra.mxu0 %v1684
        %1727 = vmatprep.subr.bf16.mxu0 0
        %1728 = vmatpush1.bf16.msra.mxu0 %v1685
        %1729 = vmatprep.subr.bf16.mxu0 0
        %1730 = vmatpush1.bf16.msra.mxu0 %v1686
        %1731 = vmatprep.subr.bf16.mxu0 0
        %1732 = vmatpush1.bf16.msra.mxu0 %v1687
        %1733 = vmatprep.subr.bf16.mxu0 0
        %1734 = vmatpush1.bf16.msra.mxu0 %v1688
        %1735 = vmatprep.subr.bf16.mxu0 0
        %1736 = vmatpush1.bf16.msra.mxu0 %v1689
        %1737 = vmatprep.subr.bf16.mxu0 0
        %1738 = vmatpush1.bf16.msra.mxu0 %v1690
        %1739 = vmatprep.mubr.bf16.mxu0 %v690
        %1740 = vmatmul.mubr.bf16.gmra.mrb[0].mxu0 %v689
        %v1741 = vpop.f32.mrb[0].mxu0
        %v1742 = vadd.f32 %v1609, %v1741
        %v1743 = vpop.f32.mrb[0].mxu0
        %v1744 = vpop.f32.mrb[0].mxu0
        %v1745 = vadd.f32 %v1609, %v1744
        %v1746 = vpop.f32.mrb[0].mxu0
        %1747 = vmatprep.mubr.bf16.mxu0 %v692
        %1748 = vmatmul.mubr.bf16.gmra.mrb[0].mxu0 %v691
        %v1749 = vpop.f32.mrb[0].mxu0
        %v1750 = vadd.f32 %v1609, %v1749
        %v1751 = vpop.f32.mrb[0].mxu0
        %v1752 = vpop.f32.mrb[0].mxu0
        %v1753 = vadd.f32 %v1609, %v1752
        %v1754 = vpop.f32.mrb[0].mxu0
        %1755 = vdwg.mxu0
        %v1756 = vtanh.pop %v1742
        %v1757 = vtanh.pop %v1745
        %v1758 = vtanh.pop %v1750
        %v1759 = vtanh.pop %v1753
        %v1760 = vpack.c.bf16 %v1757, %v1756
        %v1761 = vpack.c.bf16 %v1759, %v1758
        %v1764 = vunpack.c.l.b16 %v1760
        %v1765 = vunpack.c.h.b16 %v1760
        %v1766 = vunpack.c.l.b16 %v1761
        %v1767 = vunpack.c.h.b16 %v1761
        %v1768 = vpack.c.b16 %v1764, %v1764
        %v1769 = vpack.c.b16 %v1765, %v1765
        %v1770 = vpack.c.b16 %v1766, %v1766
        %v1771 = vpack.c.b16 %v1767, %v1767
        %vm1776 = vcmask 125952
        %1777 = vst.msk [vmem:[%s272 + $0x18] sm:$0xf] %vm1776, %v1768
        %1778 = vst.msk [vmem:[%s272 + $0x34] sm:$0xf] %vm1776, %v1769
        %1779 = vst.msk [vmem:[%s272 + $0x50] sm:$0xf] %vm1776, %v1770
        %1780 = vst.msk [vmem:[%s272 + $0x6c] sm:$0xf] %vm1776, %v1771
        %s1781 = sand.u32 %s181, 1
        %s1782 = scalar_lea.sflag [#allocation3], %s1781
        %s1783 = sand.u32 %s181, 1
        %s1784 = smul.addr %s1783, 112
        %s1785 = scalar_lea.vmem [#allocation2], %s1784
        // Predicated region
        $region49: #{tpu_custom_call.1} parent=47 // pred_check
          %p1786 = pneg %p191
        $region50: #{tpu_custom_call.1} parent=47 // pred_check_branch
          %1788 = sbr.rel (%p1786) target = $region52
        $region51: #{tpu_custom_call.1} parent=47 // pred_region
          %s1789 = smul.u32 4, %s21
          %s1791 = ssub.s32 1792, 1792
          %1792 = vsyncadd %s1782, %s1791
          %s1793 = smul.addr %s1789, 7
          %s1794 = smul.addr %s1793, 64
          %s1795 = scalar_lea.hbm %s7, %s1794
          %s1796 = sshll.u32 %s1785, 4
          %s1797 = int_to_ptr.vmem [resolvable:$true] %s1796
          %1802 = dma.vmem_to_hbm [thread:$0]  %s1797, 1792, %s1795, %s1782, 448, 448, 28
        $region52: #{tpu_custom_call.1} parent=47 // pred_fallthru
          _
      $region48: #{tpu_custom_call.1} parent=5 // pred_fallthru
        _
      %p1803 = scmp.le.s32.totalorder 2, %s16
      // Predicated region
      $region53: #{tpu_custom_call.1} parent=5 // pred_check
        %p1804 = pneg %p1803
      $region54: #{tpu_custom_call.1} parent=5 // pred_check_branch
        %1806 = sbr.rel (%p1804) target = $region56
      $region55: #{tpu_custom_call.1} parent=5 // pred_region
        %s1807 = ssub.s32 %s16, 2
        // Predicated region
        $region57: #{tpu_custom_call.1} parent=55 // pred_check
          %p1808 = pneg %p197
        $region58: #{tpu_custom_call.1} parent=55 // pred_check_branch
          %1810 = sbr.rel (%p1808) target = $region60
        $region59: #{tpu_custom_call.1} parent=55 // pred_region
          %s1811 = sand.u32 %s182, 1
          %s1812 = scalar_lea.sflag [#allocation3], %s1811
          %s1813 = sand.u32 %s182, 1
          %s1814 = smul.addr %s1813, 112
          %s1815 = scalar_lea.vmem [#allocation2], %s1814
          %1816 = dma.done %s1812, 1792
        $region60: #{tpu_custom_call.1} parent=55 // pred_fallthru
          _
      $region56: #{tpu_custom_call.1} parent=5 // pred_fallthru
        _
    $region6: #{tpu_custom_call.1} parent=1 // loop_footer
      %s20 = sadd.s32 1, %s16
    $region7: #{tpu_custom_call.1} parent=1 // loop_footer_branch
      %15 = sbr.rel target = $region3
    $region8: #{tpu_custom_call.1} parent=1 // loop_exit
      _
    %1817 = vsyncpa [#allocation3], 1
    %s1818 = scalar_lea.sflag [#allocation3], 1
    %1819 = vsyncpa %s1818, 1

</llo_original>
